<compile_context>
chip_gen: v6e
topology: v6e:2x2x1
jax: 0.10.0
libtpu: 0.0.40
codegen_flags: <defaults>
</compile_context>

<pallas_src>
import jax
import jax.numpy as jnp
from jax import lax
from jax.experimental import pallas as pl
from jax.experimental.pallas import tpu as pltpu


def _sigmoid(x):
    # sigmoid(x) == 0.5 * tanh(0.5 * x) + 0.5  -> single EUP push (vs exp + recip)
    return 0.5 * jnp.tanh(0.5 * x) + 0.5


def lstm_classifier_kernel(x_ref, wih_ref, whh_ref, b_ref, wfc_ref, bfc_ref,
                           out_ref, xg_sc):
    TB, _ = x_ref.shape                 # (T*Bb, I), rows ordered t-major, b-minor
    Hp = whh_ref.shape[0]               # padded hidden size (multiple of 128)
    Bb = out_ref.shape[0]               # batch-block rows (multiple of 8)
    T = TB // Bb

    # ---- Phase 1: input projection for ALL timesteps as one big MXU matmul ----
    # gates_in[t*Bb + b, :] = x[b, t, :] @ W_ih^T + (b_ih + b_hh)
    xg_sc[...] = (
        jnp.dot(x_ref[...], wih_ref[...], preferred_element_type=jnp.float32)
        + b_ref[...])                   # bias broadcast once, outside the loop

    whh = whh_ref[...]                  # (Hp, 4Hp), loaded once, stays resident

    # ---- Phase 2: sequential recurrence over T, fully in-kernel ----
    def step(t, carry):
        h, c = carry
        row = pl.multiple_of(t * Bb, 8)                    # sublane-aligned start
        gates = xg_sc[pl.ds(row, Bb), :] + jnp.dot(
            h, whh, preferred_element_type=jnp.float32)    # (Bb, 4Hp)
        # PyTorch gate order i, f, g, o; slices are lane-aligned (Hp % 128 == 0).
        i_g = _sigmoid(gates[:, 0 * Hp:1 * Hp])
        f_g = _sigmoid(gates[:, 1 * Hp:2 * Hp])
        g_g = jnp.tanh(gates[:, 2 * Hp:3 * Hp])
        o_g = _sigmoid(gates[:, 3 * Hp:4 * Hp])
        c_new = f_g * c + i_g * g_g
        h_new = o_g * jnp.tanh(c_new)
        return h_new, c_new

    h0 = jnp.zeros((Bb, Hp), jnp.float32)
    c0 = jnp.zeros((Bb, Hp), jnp.float32)
    h, _ = lax.fori_loop(0, T, step, (h0, c0), unroll=(T <= 16))

    # ---- Phase 3: dropout (identity at inference) + FC head, lane-dense store ----
    # TODO(synk): Dropout(p=0.5) training-mode masking not implemented (inference).
    logits = (jnp.dot(h, wfc_ref[...], preferred_element_type=jnp.float32)
              + bfc_ref[...])
    out_ref[...] = logits.astype(out_ref.dtype)


def _round_up(n, m):
    return ((n + m - 1) // m) * m


def _pick_batch_block(B, T, Hp, budget_bytes=6 << 20):
    """Largest batch block (multiple of 8, <=256) whose hoisted gate scratch
    (T*Bb, 4*Hp) f32 fits in a conservative VMEM budget."""
    per_row = 4 * Hp * 4                       # bytes per (t, b) row of scratch
    bb_cap = max(8, (budget_bytes // (T * per_row)) // 8 * 8)
    return max(8, min(_round_up(B, 8), 256, bb_cap))


def lstm_classifier(x, w_ih, w_hh, b_ih, b_hh, w_fc, b_fc):
    """x: (B, T, I) float32. Returns (B, num_classes) float32."""
    B, T, I = x.shape
    H = w_hh.shape[1]                   # w_hh: (4H, H)
    C = w_fc.shape[0]                   # w_fc: (C, H)
    f32 = jnp.float32

    # ---- Padded / blocked sizes (plain-JAX glue outside the kernel) ----
    Hp = _round_up(H, 128)              # lane-aligned gate slices
    Cp = _round_up(C, 128)              # lane-dense logits store
    Bb = _pick_batch_block(B, T, Hp)    # >=8 sublanes, VMEM-budgeted MXU rows
    Bp = _round_up(B, Bb)
    n_b = Bp // Bb                      # independent batch blocks -> parallel grid

    # Reorganize LSTM weights (PyTorch packs gate rows [i; f; g; o] along 4H):
    # pad each gate's H block out to Hp so every gate is a whole-vreg slice.
    def pad_gate_rows(w):               # (4H, K) -> (4Hp, K), zero padding
        w4 = w.reshape(4, H, -1)
        w4 = jnp.pad(w4, ((0, 0), (0, Hp - H), (0, 0)))
        return w4.reshape(4 * Hp, -1)

    wih_t = pad_gate_rows(w_ih.astype(f32)).T                        # (I, 4Hp)
    whh_p = jnp.pad(pad_gate_rows(w_hh.astype(f32)), ((0, 0), (0, Hp - H)))
    whh_t = whh_p.T                                                  # (Hp, 4Hp)
    bias = pad_gate_rows((b_ih + b_hh).astype(f32)[:, None])[:, 0].reshape(1, 4 * Hp)
    # Padded gate columns have weight 0 / bias 0 => padded hidden units stay
    # exactly 0 through the recurrence (c starts at 0), so results are unchanged.

    wfc_t = jnp.pad(w_fc.astype(f32), ((0, Cp - C), (0, Hp - H))).T  # (Hp, Cp)
    bfc = jnp.pad(b_fc.astype(f32), (0, Cp - C)).reshape(1, Cp)

    # x: (B, T, I) -> per-batch-block, time-major, flattened rows (t*Bb + b),
    # so the input projection is a single contiguous (T*Bb, I) matmul.
    x_p = jnp.pad(x.astype(f32), ((0, Bp - B), (0, 0), (0, 0)))      # (Bp, T, I)
    x_blk = (x_p.reshape(n_b, Bb, T, I)
                 .transpose(0, 2, 1, 3)                              # (n_b, T, Bb, I)
                 .reshape(n_b, T * Bb, I))

    const2d = lambda shape: pl.BlockSpec(shape, lambda ib: (0, 0))

    out = pl.pallas_call(
        lstm_classifier_kernel,
        out_shape=jax.ShapeDtypeStruct((Bp, Cp), f32),
        grid_spec=pltpu.PrefetchScalarGridSpec(
            num_scalar_prefetch=0,
            grid=(n_b,),                                   # independent batch blocks
            in_specs=[
                pl.BlockSpec((None, T * Bb, I), lambda ib: (ib, 0, 0)),  # x block
                const2d((I, 4 * Hp)),                      # W_ih^T  (gate-padded)
                const2d((Hp, 4 * Hp)),                     # W_hh^T  (gate-padded)
                const2d((1, 4 * Hp)),                      # b_ih + b_hh
                const2d((Hp, Cp)),                         # W_fc^T
                const2d((1, Cp)),                          # b_fc
            ],
            out_specs=pl.BlockSpec((Bb, Cp), lambda ib: (ib, 0)),
            scratch_shapes=[
                pltpu.VMEM((T * Bb, 4 * Hp), f32),         # hoisted x @ W_ih^T + b
            ],
        ),
        compiler_params=pltpu.CompilerParams(
            dimension_semantics=("parallel",)),            # batch blocks -> cores
    )(x_blk, wih_t, whh_t, bias, wfc_t, bfc)

    return out[:B, :C]


def lstm_classifier_ref(x, w_ih, w_hh, b_ih, b_hh, w_fc, b_fc):
    """Pure-JAX reference matching PyTorch nn.LSTM semantics."""
    B, T, I = x.shape
    H = w_hh.shape[1]
    h = jnp.zeros((B, H), jnp.float32)
    c = jnp.zeros((B, H), jnp.float32)
    for t in range(T):
        gates = x[:, t, :] @ w_ih.T + h @ w_hh.T + b_ih + b_hh
        i_g = jax.nn.sigmoid(gates[:, 0 * H:1 * H])
        f_g = jax.nn.sigmoid(gates[:, 1 * H:2 * H])
        g_g = jnp.tanh(gates[:, 2 * H:3 * H])
        o_g = jax.nn.sigmoid(gates[:, 3 * H:4 * H])
        c = f_g * c + i_g * g_g
        h = o_g * jnp.tanh(c)
    return h @ w_fc.T + b_fc


if __name__ == "__main__":
    # Small shapes consistent with the module's forward.
    B, T, I, H, C = 2, 8, 16, 32, 8

    key = jax.random.PRNGKey(0)
    ks = jax.random.split(key, 7)
    scale = 1.0 / jnp.sqrt(H)

    x = jax.random.normal(ks[0], (B, T, I), jnp.float32)
    w_ih = jax.random.uniform(ks[1], (4 * H, I), jnp.float32, -scale, scale)
    w_hh = jax.random.uniform(ks[2], (4 * H, H), jnp.float32, -scale, scale)
    b_ih = jax.random.uniform(ks[3], (4 * H,), jnp.float32, -scale, scale)
    b_hh = jax.random.uniform(ks[4], (4 * H,), jnp.float32, -scale, scale)
    w_fc = jax.random.uniform(ks[5], (C, H), jnp.float32, -scale, scale)
    b_fc = jax.random.uniform(ks[6], (C,), jnp.float32, -scale, scale)

    out = lstm_classifier(x, w_ih, w_hh, b_ih, b_hh, w_fc, b_fc)
    out = jax.block_until_ready(out)

    ref = lstm_classifier_ref(x, w_ih, w_hh, b_ih, b_hh, w_fc, b_fc)
    assert out.shape == (B, C)
    assert jnp.allclose(out, ref, atol=2e-5, rtol=2e-5), "mismatch vs JAX reference"

    print("KERNEL_OK")
</pallas_src>

<mosaic_0001>
module attributes {stable_mosaic.version = 11 : i64} {
  func.func @lstm_classifier_kernel(%arg0: i32, %arg1: memref<1x64x16xf32, #tpu.memory_space<vmem>>, %arg2: memref<16x512xf32, #tpu.memory_space<vmem>>, %arg3: memref<128x512xf32, #tpu.memory_space<vmem>>, %arg4: memref<1x512xf32, #tpu.memory_space<vmem>>, %arg5: memref<128x128xf32, #tpu.memory_space<vmem>>, %arg6: memref<1x128xf32, #tpu.memory_space<vmem>>, %arg7: memref<8x128xf32, #tpu.memory_space<vmem>>, %arg8: memref<64x512xf32, #tpu.memory_space<vmem>>) attributes {dimension_semantics = [#tpu.dimension_semantics<parallel>], iteration_bounds = array<i64: 1>, scalar_prefetch = 0 : i64, scratch_operands = 1 : i64, tpu.core_type = #tpu.core_type<tc>, window_params = [{transform_indices = @transform_0, window_bounds = array<i64: 1, 64, 16>}, {pipeline_mode = #tpu.pipeline_mode<synchronous>, transform_indices = @transform_1, window_bounds = array<i64: 16, 512>}, {pipeline_mode = #tpu.pipeline_mode<synchronous>, transform_indices = @transform_2, window_bounds = array<i64: 128, 512>}, {pipeline_mode = #tpu.pipeline_mode<synchronous>, transform_indices = @transform_3, window_bounds = array<i64: 1, 512>}, {pipeline_mode = #tpu.pipeline_mode<synchronous>, transform_indices = @transform_4, window_bounds = array<i64: 128, 128>}, {pipeline_mode = #tpu.pipeline_mode<synchronous>, transform_indices = @transform_5, window_bounds = array<i64: 1, 128>}, {transform_indices = @transform_6, window_bounds = array<i64: 8, 128>}]} {
    %c0 = arith.constant 0 : index
    %c0_0 = arith.constant 0 : index
    %c0_1 = arith.constant 0 : index
    %0 = vector.load %arg1[%c0, %c0_0, %c0_1] : memref<1x64x16xf32, #tpu.memory_space<vmem>>, vector<1x64x16xf32>
    %1 = vector.shape_cast %0 : vector<1x64x16xf32> to vector<64x16xf32>
    %c0_2 = arith.constant 0 : index
    %c0_3 = arith.constant 0 : index
    %2 = vector.load %arg2[%c0_2, %c0_3] : memref<16x512xf32, #tpu.memory_space<vmem>>, vector<16x512xf32>
    %cst = arith.constant dense<0.000000e+00> : vector<64x512xf32>
    %3 = tpu.matmul %1, %2, %cst {dimension_numbers = #tpu.dot_dimension_numbers<[1], [0], [0], [1], [0, 0, 1, 1], [], []>} : vector<64x16xf32>, vector<16x512xf32>, vector<64x512xf32> -> vector<64x512xf32>
    %c0_4 = arith.constant 0 : index
    %c0_5 = arith.constant 0 : index
    %4 = vector.load %arg4[%c0_4, %c0_5] : memref<1x512xf32, #tpu.memory_space<vmem>>, vector<1x512xf32>
    %5 = vector.broadcast %4 : vector<1x512xf32> to vector<64x512xf32>
    %6 = arith.addf %3, %5 : vector<64x512xf32>
    %c0_6 = arith.constant 0 : index
    %c0_7 = arith.constant 0 : index
    %7 = vector.load %arg8[%c0_6, %c0_7] : memref<64x512xf32, #tpu.memory_space<vmem>>, vector<64x512xf32>
    tpu.vector_store %arg8[%c0_6, %c0_7], %6 {strides = array<i32>} : memref<64x512xf32, #tpu.memory_space<vmem>>, vector<64x512xf32>,
    %c0_8 = arith.constant 0 : index
    %c0_9 = arith.constant 0 : index
    %8 = vector.load %arg3[%c0_8, %c0_9] : memref<128x512xf32, #tpu.memory_space<vmem>>, vector<128x512xf32>
    %cst_10 = arith.constant 0.000000e+00 : f32
    %9 = vector.broadcast %cst_10 : f32 to vector<8x128xf32>
    %cst_11 = arith.constant 0.000000e+00 : f32
    %10 = vector.broadcast %cst_11 : f32 to vector<8x128xf32>
    %c0_i32 = arith.constant 0 : i32
    %c8_i32 = arith.constant 8 : i32
    %11 = arith.muli %c0_i32, %c8_i32 : i32
    %12 = tpu.assume_multiple %11, 8 : i32
    %13 = arith.index_cast %12 : i32 to index
    %c0_12 = arith.constant 0 : index
    %14 = vector.load %arg8[%13, %c0_12] : memref<64x512xf32, #tpu.memory_space<vmem>>, vector<8x512xf32>
    %cst_13 = arith.constant dense<0.000000e+00> : vector<8x512xf32>
    %15 = tpu.matmul %9, %8, %cst_13 {dimension_numbers = #tpu.dot_dimension_numbers<[1], [0], [0], [1], [0, 0, 1, 1], [], []>} : vector<8x128xf32>, vector<128x512xf32>, vector<8x512xf32> -> vector<8x512xf32>
    %16 = arith.addf %14, %15 : vector<8x512xf32>
    %17 = vector.extract_strided_slice %16 {offsets = [0, 0], sizes = [8, 128], strides = [1, 1]} : vector<8x512xf32> to vector<8x128xf32>
    %cst_14 = arith.constant 5.000000e-01 : f32
    %18 = vector.broadcast %cst_14 : f32 to vector<8x128xf32>
    %19 = arith.mulf %18, %17 : vector<8x128xf32>
    %20 = math.tanh %19 : vector<8x128xf32>
    %cst_15 = arith.constant 5.000000e-01 : f32
    %21 = vector.broadcast %cst_15 : f32 to vector<8x128xf32>
    %22 = arith.mulf %21, %20 : vector<8x128xf32>
    %cst_16 = arith.constant 5.000000e-01 : f32
    %23 = vector.broadcast %cst_16 : f32 to vector<8x128xf32>
    %24 = arith.addf %22, %23 : vector<8x128xf32>
    %25 = vector.extract_strided_slice %16 {offsets = [0, 128], sizes = [8, 128], strides = [1, 1]} : vector<8x512xf32> to vector<8x128xf32>
    %cst_17 = arith.constant 5.000000e-01 : f32
    %26 = vector.broadcast %cst_17 : f32 to vector<8x128xf32>
    %27 = arith.mulf %26, %25 : vector<8x128xf32>
    %28 = math.tanh %27 : vector<8x128xf32>
    %cst_18 = arith.constant 5.000000e-01 : f32
    %29 = vector.broadcast %cst_18 : f32 to vector<8x128xf32>
    %30 = arith.mulf %29, %28 : vector<8x128xf32>
    %cst_19 = arith.constant 5.000000e-01 : f32
    %31 = vector.broadcast %cst_19 : f32 to vector<8x128xf32>
    %32 = arith.addf %30, %31 : vector<8x128xf32>
    %33 = vector.extract_strided_slice %16 {offsets = [0, 256], sizes = [8, 128], strides = [1, 1]} : vector<8x512xf32> to vector<8x128xf32>
    %34 = math.tanh %33 : vector<8x128xf32>
    %35 = vector.extract_strided_slice %16 {offsets = [0, 384], sizes = [8, 128], strides = [1, 1]} : vector<8x512xf32> to vector<8x128xf32>
    %cst_20 = arith.constant 5.000000e-01 : f32
    %36 = vector.broadcast %cst_20 : f32 to vector<8x128xf32>
    %37 = arith.mulf %36, %35 : vector<8x128xf32>
    %38 = math.tanh %37 : vector<8x128xf32>
    %cst_21 = arith.constant 5.000000e-01 : f32
    %39 = vector.broadcast %cst_21 : f32 to vector<8x128xf32>
    %40 = arith.mulf %39, %38 : vector<8x128xf32>
    %cst_22 = arith.constant 5.000000e-01 : f32
    %41 = vector.broadcast %cst_22 : f32 to vector<8x128xf32>
    %42 = arith.addf %40, %41 : vector<8x128xf32>
    %43 = arith.mulf %32, %10 : vector<8x128xf32>
    %44 = arith.mulf %24, %34 : vector<8x128xf32>
    %45 = arith.addf %43, %44 : vector<8x128xf32>
    %46 = math.tanh %45 : vector<8x128xf32>
    %47 = arith.mulf %42, %46 : vector<8x128xf32>
    %c1_i32 = arith.constant 1 : i32
    %c8_i32_23 = arith.constant 8 : i32
    %48 = arith.muli %c1_i32, %c8_i32_23 : i32
    %49 = tpu.assume_multiple %48, 8 : i32
    %50 = arith.index_cast %49 : i32 to index
    %c0_24 = arith.constant 0 : index
    %51 = vector.load %arg8[%50, %c0_24] : memref<64x512xf32, #tpu.memory_space<vmem>>, vector<8x512xf32>
    %cst_25 = arith.constant dense<0.000000e+00> : vector<8x512xf32>
    %52 = tpu.matmul %47, %8, %cst_25 {dimension_numbers = #tpu.dot_dimension_numbers<[1], [0], [0], [1], [0, 0, 1, 1], [], []>} : vector<8x128xf32>, vector<128x512xf32>, vector<8x512xf32> -> vector<8x512xf32>
    %53 = arith.addf %51, %52 : vector<8x512xf32>
    %54 = vector.extract_strided_slice %53 {offsets = [0, 0], sizes = [8, 128], strides = [1, 1]} : vector<8x512xf32> to vector<8x128xf32>
    %cst_26 = arith.constant 5.000000e-01 : f32
    %55 = vector.broadcast %cst_26 : f32 to vector<8x128xf32>
    %56 = arith.mulf %55, %54 : vector<8x128xf32>
    %57 = math.tanh %56 : vector<8x128xf32>
    %cst_27 = arith.constant 5.000000e-01 : f32
    %58 = vector.broadcast %cst_27 : f32 to vector<8x128xf32>
    %59 = arith.mulf %58, %57 : vector<8x128xf32>
    %cst_28 = arith.constant 5.000000e-01 : f32
    %60 = vector.broadcast %cst_28 : f32 to vector<8x128xf32>
    %61 = arith.addf %59, %60 : vector<8x128xf32>
    %62 = vector.extract_strided_slice %53 {offsets = [0, 128], sizes = [8, 128], strides = [1, 1]} : vector<8x512xf32> to vector<8x128xf32>
    %cst_29 = arith.constant 5.000000e-01 : f32
    %63 = vector.broadcast %cst_29 : f32 to vector<8x128xf32>
    %64 = arith.mulf %63, %62 : vector<8x128xf32>
    %65 = math.tanh %64 : vector<8x128xf32>
    %cst_30 = arith.constant 5.000000e-01 : f32
    %66 = vector.broadcast %cst_30 : f32 to vector<8x128xf32>
    %67 = arith.mulf %66, %65 : vector<8x128xf32>
    %cst_31 = arith.constant 5.000000e-01 : f32
    %68 = vector.broadcast %cst_31 : f32 to vector<8x128xf32>
    %69 = arith.addf %67, %68 : vector<8x128xf32>
    %70 = vector.extract_strided_slice %53 {offsets = [0, 256], sizes = [8, 128], strides = [1, 1]} : vector<8x512xf32> to vector<8x128xf32>
    %71 = math.tanh %70 : vector<8x128xf32>
    %72 = vector.extract_strided_slice %53 {offsets = [0, 384], sizes = [8, 128], strides = [1, 1]} : vector<8x512xf32> to vector<8x128xf32>
    %cst_32 = arith.constant 5.000000e-01 : f32
    %73 = vector.broadcast %cst_32 : f32 to vector<8x128xf32>
    %74 = arith.mulf %73, %72 : vector<8x128xf32>
    %75 = math.tanh %74 : vector<8x128xf32>
    %cst_33 = arith.constant 5.000000e-01 : f32
    %76 = vector.broadcast %cst_33 : f32 to vector<8x128xf32>
    %77 = arith.mulf %76, %75 : vector<8x128xf32>
    %cst_34 = arith.constant 5.000000e-01 : f32
    %78 = vector.broadcast %cst_34 : f32 to vector<8x128xf32>
    %79 = arith.addf %77, %78 : vector<8x128xf32>
    %80 = arith.mulf %69, %45 : vector<8x128xf32>
    %81 = arith.mulf %61, %71 : vector<8x128xf32>
    %82 = arith.addf %80, %81 : vector<8x128xf32>
    %83 = math.tanh %82 : vector<8x128xf32>
    %84 = arith.mulf %79, %83 : vector<8x128xf32>
    %c2_i32 = arith.constant 2 : i32
    %c8_i32_35 = arith.constant 8 : i32
    %85 = arith.muli %c2_i32, %c8_i32_35 : i32
    %86 = tpu.assume_multiple %85, 8 : i32
    %87 = arith.index_cast %86 : i32 to index
    %c0_36 = arith.constant 0 : index
    %88 = vector.load %arg8[%87, %c0_36] : memref<64x512xf32, #tpu.memory_space<vmem>>, vector<8x512xf32>
    %cst_37 = arith.constant dense<0.000000e+00> : vector<8x512xf32>
    %89 = tpu.matmul %84, %8, %cst_37 {dimension_numbers = #tpu.dot_dimension_numbers<[1], [0], [0], [1], [0, 0, 1, 1], [], []>} : vector<8x128xf32>, vector<128x512xf32>, vector<8x512xf32> -> vector<8x512xf32>
    %90 = arith.addf %88, %89 : vector<8x512xf32>
    %91 = vector.extract_strided_slice %90 {offsets = [0, 0], sizes = [8, 128], strides = [1, 1]} : vector<8x512xf32> to vector<8x128xf32>
    %cst_38 = arith.constant 5.000000e-01 : f32
    %92 = vector.broadcast %cst_38 : f32 to vector<8x128xf32>
    %93 = arith.mulf %92, %91 : vector<8x128xf32>
    %94 = math.tanh %93 : vector<8x128xf32>
    %cst_39 = arith.constant 5.000000e-01 : f32
    %95 = vector.broadcast %cst_39 : f32 to vector<8x128xf32>
    %96 = arith.mulf %95, %94 : vector<8x128xf32>
    %cst_40 = arith.constant 5.000000e-01 : f32
    %97 = vector.broadcast %cst_40 : f32 to vector<8x128xf32>
    %98 = arith.addf %96, %97 : vector<8x128xf32>
    %99 = vector.extract_strided_slice %90 {offsets = [0, 128], sizes = [8, 128], strides = [1, 1]} : vector<8x512xf32> to vector<8x128xf32>
    %cst_41 = arith.constant 5.000000e-01 : f32
    %100 = vector.broadcast %cst_41 : f32 to vector<8x128xf32>
    %101 = arith.mulf %100, %99 : vector<8x128xf32>
    %102 = math.tanh %101 : vector<8x128xf32>
    %cst_42 = arith.constant 5.000000e-01 : f32
    %103 = vector.broadcast %cst_42 : f32 to vector<8x128xf32>
    %104 = arith.mulf %103, %102 : vector<8x128xf32>
    %cst_43 = arith.constant 5.000000e-01 : f32
    %105 = vector.broadcast %cst_43 : f32 to vector<8x128xf32>
    %106 = arith.addf %104, %105 : vector<8x128xf32>
    %107 = vector.extract_strided_slice %90 {offsets = [0, 256], sizes = [8, 128], strides = [1, 1]} : vector<8x512xf32> to vector<8x128xf32>
    %108 = math.tanh %107 : vector<8x128xf32>
    %109 = vector.extract_strided_slice %90 {offsets = [0, 384], sizes = [8, 128], strides = [1, 1]} : vector<8x512xf32> to vector<8x128xf32>
    %cst_44 = arith.constant 5.000000e-01 : f32
    %110 = vector.broadcast %cst_44 : f32 to vector<8x128xf32>
    %111 = arith.mulf %110, %109 : vector<8x128xf32>
    %112 = math.tanh %111 : vector<8x128xf32>
    %cst_45 = arith.constant 5.000000e-01 : f32
    %113 = vector.broadcast %cst_45 : f32 to vector<8x128xf32>
    %114 = arith.mulf %113, %112 : vector<8x128xf32>
    %cst_46 = arith.constant 5.000000e-01 : f32
    %115 = vector.broadcast %cst_46 : f32 to vector<8x128xf32>
    %116 = arith.addf %114, %115 : vector<8x128xf32>
    %117 = arith.mulf %106, %82 : vector<8x128xf32>
    %118 = arith.mulf %98, %108 : vector<8x128xf32>
    %119 = arith.addf %117, %118 : vector<8x128xf32>
    %120 = math.tanh %119 : vector<8x128xf32>
    %121 = arith.mulf %116, %120 : vector<8x128xf32>
    %c3_i32 = arith.constant 3 : i32
    %c8_i32_47 = arith.constant 8 : i32
    %122 = arith.muli %c3_i32, %c8_i32_47 : i32
    %123 = tpu.assume_multiple %122, 8 : i32
    %124 = arith.index_cast %123 : i32 to index
    %c0_48 = arith.constant 0 : index
    %125 = vector.load %arg8[%124, %c0_48] : memref<64x512xf32, #tpu.memory_space<vmem>>, vector<8x512xf32>
    %cst_49 = arith.constant dense<0.000000e+00> : vector<8x512xf32>
    %126 = tpu.matmul %121, %8, %cst_49 {dimension_numbers = #tpu.dot_dimension_numbers<[1], [0], [0], [1], [0, 0, 1, 1], [], []>} : vector<8x128xf32>, vector<128x512xf32>, vector<8x512xf32> -> vector<8x512xf32>
    %127 = arith.addf %125, %126 : vector<8x512xf32>
    %128 = vector.extract_strided_slice %127 {offsets = [0, 0], sizes = [8, 128], strides = [1, 1]} : vector<8x512xf32> to vector<8x128xf32>
    %cst_50 = arith.constant 5.000000e-01 : f32
    %129 = vector.broadcast %cst_50 : f32 to vector<8x128xf32>
    %130 = arith.mulf %129, %128 : vector<8x128xf32>
    %131 = math.tanh %130 : vector<8x128xf32>
    %cst_51 = arith.constant 5.000000e-01 : f32
    %132 = vector.broadcast %cst_51 : f32 to vector<8x128xf32>
    %133 = arith.mulf %132, %131 : vector<8x128xf32>
    %cst_52 = arith.constant 5.000000e-01 : f32
    %134 = vector.broadcast %cst_52 : f32 to vector<8x128xf32>
    %135 = arith.addf %133, %134 : vector<8x128xf32>
    %136 = vector.extract_strided_slice %127 {offsets = [0, 128], sizes = [8, 128], strides = [1, 1]} : vector<8x512xf32> to vector<8x128xf32>
    %cst_53 = arith.constant 5.000000e-01 : f32
    %137 = vector.broadcast %cst_53 : f32 to vector<8x128xf32>
    %138 = arith.mulf %137, %136 : vector<8x128xf32>
    %139 = math.tanh %138 : vector<8x128xf32>
    %cst_54 = arith.constant 5.000000e-01 : f32
    %140 = vector.broadcast %cst_54 : f32 to vector<8x128xf32>
    %141 = arith.mulf %140, %139 : vector<8x128xf32>
    %cst_55 = arith.constant 5.000000e-01 : f32
    %142 = vector.broadcast %cst_55 : f32 to vector<8x128xf32>
    %143 = arith.addf %141, %142 : vector<8x128xf32>
    %144 = vector.extract_strided_slice %127 {offsets = [0, 256], sizes = [8, 128], strides = [1, 1]} : vector<8x512xf32> to vector<8x128xf32>
    %145 = math.tanh %144 : vector<8x128xf32>
    %146 = vector.extract_strided_slice %127 {offsets = [0, 384], sizes = [8, 128], strides = [1, 1]} : vector<8x512xf32> to vector<8x128xf32>
    %cst_56 = arith.constant 5.000000e-01 : f32
    %147 = vector.broadcast %cst_56 : f32 to vector<8x128xf32>
    %148 = arith.mulf %147, %146 : vector<8x128xf32>
    %149 = math.tanh %148 : vector<8x128xf32>
    %cst_57 = arith.constant 5.000000e-01 : f32
    %150 = vector.broadcast %cst_57 : f32 to vector<8x128xf32>
    %151 = arith.mulf %150, %149 : vector<8x128xf32>
    %cst_58 = arith.constant 5.000000e-01 : f32
    %152 = vector.broadcast %cst_58 : f32 to vector<8x128xf32>
    %153 = arith.addf %151, %152 : vector<8x128xf32>
    %154 = arith.mulf %143, %119 : vector<8x128xf32>
    %155 = arith.mulf %135, %145 : vector<8x128xf32>
    %156 = arith.addf %154, %155 : vector<8x128xf32>
    %157 = math.tanh %156 : vector<8x128xf32>
    %158 = arith.mulf %153, %157 : vector<8x128xf32>
    %c4_i32 = arith.constant 4 : i32
    %c8_i32_59 = arith.constant 8 : i32
    %159 = arith.muli %c4_i32, %c8_i32_59 : i32
    %160 = tpu.assume_multiple %159, 8 : i32
    %161 = arith.index_cast %160 : i32 to index
    %c0_60 = arith.constant 0 : index
    %162 = vector.load %arg8[%161, %c0_60] : memref<64x512xf32, #tpu.memory_space<vmem>>, vector<8x512xf32>
    %cst_61 = arith.constant dense<0.000000e+00> : vector<8x512xf32>
    %163 = tpu.matmul %158, %8, %cst_61 {dimension_numbers = #tpu.dot_dimension_numbers<[1], [0], [0], [1], [0, 0, 1, 1], [], []>} : vector<8x128xf32>, vector<128x512xf32>, vector<8x512xf32> -> vector<8x512xf32>
    %164 = arith.addf %162, %163 : vector<8x512xf32>
    %165 = vector.extract_strided_slice %164 {offsets = [0, 0], sizes = [8, 128], strides = [1, 1]} : vector<8x512xf32> to vector<8x128xf32>
    %cst_62 = arith.constant 5.000000e-01 : f32
    %166 = vector.broadcast %cst_62 : f32 to vector<8x128xf32>
    %167 = arith.mulf %166, %165 : vector<8x128xf32>
    %168 = math.tanh %167 : vector<8x128xf32>
    %cst_63 = arith.constant 5.000000e-01 : f32
    %169 = vector.broadcast %cst_63 : f32 to vector<8x128xf32>
    %170 = arith.mulf %169, %168 : vector<8x128xf32>
    %cst_64 = arith.constant 5.000000e-01 : f32
    %171 = vector.broadcast %cst_64 : f32 to vector<8x128xf32>
    %172 = arith.addf %170, %171 : vector<8x128xf32>
    %173 = vector.extract_strided_slice %164 {offsets = [0, 128], sizes = [8, 128], strides = [1, 1]} : vector<8x512xf32> to vector<8x128xf32>
    %cst_65 = arith.constant 5.000000e-01 : f32
    %174 = vector.broadcast %cst_65 : f32 to vector<8x128xf32>
    %175 = arith.mulf %174, %173 : vector<8x128xf32>
    %176 = math.tanh %175 : vector<8x128xf32>
    %cst_66 = arith.constant 5.000000e-01 : f32
    %177 = vector.broadcast %cst_66 : f32 to vector<8x128xf32>
    %178 = arith.mulf %177, %176 : vector<8x128xf32>
    %cst_67 = arith.constant 5.000000e-01 : f32
    %179 = vector.broadcast %cst_67 : f32 to vector<8x128xf32>
    %180 = arith.addf %178, %179 : vector<8x128xf32>
    %181 = vector.extract_strided_slice %164 {offsets = [0, 256], sizes = [8, 128], strides = [1, 1]} : vector<8x512xf32> to vector<8x128xf32>
    %182 = math.tanh %181 : vector<8x128xf32>
    %183 = vector.extract_strided_slice %164 {offsets = [0, 384], sizes = [8, 128], strides = [1, 1]} : vector<8x512xf32> to vector<8x128xf32>
    %cst_68 = arith.constant 5.000000e-01 : f32
    %184 = vector.broadcast %cst_68 : f32 to vector<8x128xf32>
    %185 = arith.mulf %184, %183 : vector<8x128xf32>
    %186 = math.tanh %185 : vector<8x128xf32>
    %cst_69 = arith.constant 5.000000e-01 : f32
    %187 = vector.broadcast %cst_69 : f32 to vector<8x128xf32>
    %188 = arith.mulf %187, %186 : vector<8x128xf32>
    %cst_70 = arith.constant 5.000000e-01 : f32
    %189 = vector.broadcast %cst_70 : f32 to vector<8x128xf32>
    %190 = arith.addf %188, %189 : vector<8x128xf32>
    %191 = arith.mulf %180, %156 : vector<8x128xf32>
    %192 = arith.mulf %172, %182 : vector<8x128xf32>
    %193 = arith.addf %191, %192 : vector<8x128xf32>
    %194 = math.tanh %193 : vector<8x128xf32>
    %195 = arith.mulf %190, %194 : vector<8x128xf32>
    %c5_i32 = arith.constant 5 : i32
    %c8_i32_71 = arith.constant 8 : i32
    %196 = arith.muli %c5_i32, %c8_i32_71 : i32
    %197 = tpu.assume_multiple %196, 8 : i32
    %198 = arith.index_cast %197 : i32 to index
    %c0_72 = arith.constant 0 : index
    %199 = vector.load %arg8[%198, %c0_72] : memref<64x512xf32, #tpu.memory_space<vmem>>, vector<8x512xf32>
    %cst_73 = arith.constant dense<0.000000e+00> : vector<8x512xf32>
    %200 = tpu.matmul %195, %8, %cst_73 {dimension_numbers = #tpu.dot_dimension_numbers<[1], [0], [0], [1], [0, 0, 1, 1], [], []>} : vector<8x128xf32>, vector<128x512xf32>, vector<8x512xf32> -> vector<8x512xf32>
    %201 = arith.addf %199, %200 : vector<8x512xf32>
    %202 = vector.extract_strided_slice %201 {offsets = [0, 0], sizes = [8, 128], strides = [1, 1]} : vector<8x512xf32> to vector<8x128xf32>
    %cst_74 = arith.constant 5.000000e-01 : f32
    %203 = vector.broadcast %cst_74 : f32 to vector<8x128xf32>
    %204 = arith.mulf %203, %202 : vector<8x128xf32>
    %205 = math.tanh %204 : vector<8x128xf32>
    %cst_75 = arith.constant 5.000000e-01 : f32
    %206 = vector.broadcast %cst_75 : f32 to vector<8x128xf32>
    %207 = arith.mulf %206, %205 : vector<8x128xf32>
    %cst_76 = arith.constant 5.000000e-01 : f32
    %208 = vector.broadcast %cst_76 : f32 to vector<8x128xf32>
    %209 = arith.addf %207, %208 : vector<8x128xf32>
    %210 = vector.extract_strided_slice %201 {offsets = [0, 128], sizes = [8, 128], strides = [1, 1]} : vector<8x512xf32> to vector<8x128xf32>
    %cst_77 = arith.constant 5.000000e-01 : f32
    %211 = vector.broadcast %cst_77 : f32 to vector<8x128xf32>
    %212 = arith.mulf %211, %210 : vector<8x128xf32>
    %213 = math.tanh %212 : vector<8x128xf32>
    %cst_78 = arith.constant 5.000000e-01 : f32
    %214 = vector.broadcast %cst_78 : f32 to vector<8x128xf32>
    %215 = arith.mulf %214, %213 : vector<8x128xf32>
    %cst_79 = arith.constant 5.000000e-01 : f32
    %216 = vector.broadcast %cst_79 : f32 to vector<8x128xf32>
    %217 = arith.addf %215, %216 : vector<8x128xf32>
    %218 = vector.extract_strided_slice %201 {offsets = [0, 256], sizes = [8, 128], strides = [1, 1]} : vector<8x512xf32> to vector<8x128xf32>
    %219 = math.tanh %218 : vector<8x128xf32>
    %220 = vector.extract_strided_slice %201 {offsets = [0, 384], sizes = [8, 128], strides = [1, 1]} : vector<8x512xf32> to vector<8x128xf32>
    %cst_80 = arith.constant 5.000000e-01 : f32
    %221 = vector.broadcast %cst_80 : f32 to vector<8x128xf32>
    %222 = arith.mulf %221, %220 : vector<8x128xf32>
    %223 = math.tanh %222 : vector<8x128xf32>
    %cst_81 = arith.constant 5.000000e-01 : f32
    %224 = vector.broadcast %cst_81 : f32 to vector<8x128xf32>
    %225 = arith.mulf %224, %223 : vector<8x128xf32>
    %cst_82 = arith.constant 5.000000e-01 : f32
    %226 = vector.broadcast %cst_82 : f32 to vector<8x128xf32>
    %227 = arith.addf %225, %226 : vector<8x128xf32>
    %228 = arith.mulf %217, %193 : vector<8x128xf32>
    %229 = arith.mulf %209, %219 : vector<8x128xf32>
    %230 = arith.addf %228, %229 : vector<8x128xf32>
    %231 = math.tanh %230 : vector<8x128xf32>
    %232 = arith.mulf %227, %231 : vector<8x128xf32>
    %c6_i32 = arith.constant 6 : i32
    %c8_i32_83 = arith.constant 8 : i32
    %233 = arith.muli %c6_i32, %c8_i32_83 : i32
    %234 = tpu.assume_multiple %233, 8 : i32
    %235 = arith.index_cast %234 : i32 to index
    %c0_84 = arith.constant 0 : index
    %236 = vector.load %arg8[%235, %c0_84] : memref<64x512xf32, #tpu.memory_space<vmem>>, vector<8x512xf32>
    %cst_85 = arith.constant dense<0.000000e+00> : vector<8x512xf32>
    %237 = tpu.matmul %232, %8, %cst_85 {dimension_numbers = #tpu.dot_dimension_numbers<[1], [0], [0], [1], [0, 0, 1, 1], [], []>} : vector<8x128xf32>, vector<128x512xf32>, vector<8x512xf32> -> vector<8x512xf32>
    %238 = arith.addf %236, %237 : vector<8x512xf32>
    %239 = vector.extract_strided_slice %238 {offsets = [0, 0], sizes = [8, 128], strides = [1, 1]} : vector<8x512xf32> to vector<8x128xf32>
    %cst_86 = arith.constant 5.000000e-01 : f32
    %240 = vector.broadcast %cst_86 : f32 to vector<8x128xf32>
    %241 = arith.mulf %240, %239 : vector<8x128xf32>
    %242 = math.tanh %241 : vector<8x128xf32>
    %cst_87 = arith.constant 5.000000e-01 : f32
    %243 = vector.broadcast %cst_87 : f32 to vector<8x128xf32>
    %244 = arith.mulf %243, %242 : vector<8x128xf32>
    %cst_88 = arith.constant 5.000000e-01 : f32
    %245 = vector.broadcast %cst_88 : f32 to vector<8x128xf32>
    %246 = arith.addf %244, %245 : vector<8x128xf32>
    %247 = vector.extract_strided_slice %238 {offsets = [0, 128], sizes = [8, 128], strides = [1, 1]} : vector<8x512xf32> to vector<8x128xf32>
    %cst_89 = arith.constant 5.000000e-01 : f32
    %248 = vector.broadcast %cst_89 : f32 to vector<8x128xf32>
    %249 = arith.mulf %248, %247 : vector<8x128xf32>
    %250 = math.tanh %249 : vector<8x128xf32>
    %cst_90 = arith.constant 5.000000e-01 : f32
    %251 = vector.broadcast %cst_90 : f32 to vector<8x128xf32>
    %252 = arith.mulf %251, %250 : vector<8x128xf32>
    %cst_91 = arith.constant 5.000000e-01 : f32
    %253 = vector.broadcast %cst_91 : f32 to vector<8x128xf32>
    %254 = arith.addf %252, %253 : vector<8x128xf32>
    %255 = vector.extract_strided_slice %238 {offsets = [0, 256], sizes = [8, 128], strides = [1, 1]} : vector<8x512xf32> to vector<8x128xf32>
    %256 = math.tanh %255 : vector<8x128xf32>
    %257 = vector.extract_strided_slice %238 {offsets = [0, 384], sizes = [8, 128], strides = [1, 1]} : vector<8x512xf32> to vector<8x128xf32>
    %cst_92 = arith.constant 5.000000e-01 : f32
    %258 = vector.broadcast %cst_92 : f32 to vector<8x128xf32>
    %259 = arith.mulf %258, %257 : vector<8x128xf32>
    %260 = math.tanh %259 : vector<8x128xf32>
    %cst_93 = arith.constant 5.000000e-01 : f32
    %261 = vector.broadcast %cst_93 : f32 to vector<8x128xf32>
    %262 = arith.mulf %261, %260 : vector<8x128xf32>
    %cst_94 = arith.constant 5.000000e-01 : f32
    %263 = vector.broadcast %cst_94 : f32 to vector<8x128xf32>
    %264 = arith.addf %262, %263 : vector<8x128xf32>
    %265 = arith.mulf %254, %230 : vector<8x128xf32>
    %266 = arith.mulf %246, %256 : vector<8x128xf32>
    %267 = arith.addf %265, %266 : vector<8x128xf32>
    %268 = math.tanh %267 : vector<8x128xf32>
    %269 = arith.mulf %264, %268 : vector<8x128xf32>
    %c7_i32 = arith.constant 7 : i32
    %c8_i32_95 = arith.constant 8 : i32
    %270 = arith.muli %c7_i32, %c8_i32_95 : i32
    %271 = tpu.assume_multiple %270, 8 : i32
    %272 = arith.index_cast %271 : i32 to index
    %c0_96 = arith.constant 0 : index
    %273 = vector.load %arg8[%272, %c0_96] : memref<64x512xf32, #tpu.memory_space<vmem>>, vector<8x512xf32>
    %cst_97 = arith.constant dense<0.000000e+00> : vector<8x512xf32>
    %274 = tpu.matmul %269, %8, %cst_97 {dimension_numbers = #tpu.dot_dimension_numbers<[1], [0], [0], [1], [0, 0, 1, 1], [], []>} : vector<8x128xf32>, vector<128x512xf32>, vector<8x512xf32> -> vector<8x512xf32>
    %275 = arith.addf %273, %274 : vector<8x512xf32>
    %276 = vector.extract_strided_slice %275 {offsets = [0, 0], sizes = [8, 128], strides = [1, 1]} : vector<8x512xf32> to vector<8x128xf32>
    %cst_98 = arith.constant 5.000000e-01 : f32
    %277 = vector.broadcast %cst_98 : f32 to vector<8x128xf32>
    %278 = arith.mulf %277, %276 : vector<8x128xf32>
    %279 = math.tanh %278 : vector<8x128xf32>
    %cst_99 = arith.constant 5.000000e-01 : f32
    %280 = vector.broadcast %cst_99 : f32 to vector<8x128xf32>
    %281 = arith.mulf %280, %279 : vector<8x128xf32>
    %cst_100 = arith.constant 5.000000e-01 : f32
    %282 = vector.broadcast %cst_100 : f32 to vector<8x128xf32>
    %283 = arith.addf %281, %282 : vector<8x128xf32>
    %284 = vector.extract_strided_slice %275 {offsets = [0, 128], sizes = [8, 128], strides = [1, 1]} : vector<8x512xf32> to vector<8x128xf32>
    %cst_101 = arith.constant 5.000000e-01 : f32
    %285 = vector.broadcast %cst_101 : f32 to vector<8x128xf32>
    %286 = arith.mulf %285, %284 : vector<8x128xf32>
    %287 = math.tanh %286 : vector<8x128xf32>
    %cst_102 = arith.constant 5.000000e-01 : f32
    %288 = vector.broadcast %cst_102 : f32 to vector<8x128xf32>
    %289 = arith.mulf %288, %287 : vector<8x128xf32>
    %cst_103 = arith.constant 5.000000e-01 : f32
    %290 = vector.broadcast %cst_103 : f32 to vector<8x128xf32>
    %291 = arith.addf %289, %290 : vector<8x128xf32>
    %292 = vector.extract_strided_slice %275 {offsets = [0, 256], sizes = [8, 128], strides = [1, 1]} : vector<8x512xf32> to vector<8x128xf32>
    %293 = math.tanh %292 : vector<8x128xf32>
    %294 = vector.extract_strided_slice %275 {offsets = [0, 384], sizes = [8, 128], strides = [1, 1]} : vector<8x512xf32> to vector<8x128xf32>
    %cst_104 = arith.constant 5.000000e-01 : f32
    %295 = vector.broadcast %cst_104 : f32 to vector<8x128xf32>
    %296 = arith.mulf %295, %294 : vector<8x128xf32>
    %297 = math.tanh %296 : vector<8x128xf32>
    %cst_105 = arith.constant 5.000000e-01 : f32
    %298 = vector.broadcast %cst_105 : f32 to vector<8x128xf32>
    %299 = arith.mulf %298, %297 : vector<8x128xf32>
    %cst_106 = arith.constant 5.000000e-01 : f32
    %300 = vector.broadcast %cst_106 : f32 to vector<8x128xf32>
    %301 = arith.addf %299, %300 : vector<8x128xf32>
    %302 = arith.mulf %291, %267 : vector<8x128xf32>
    %303 = arith.mulf %283, %293 : vector<8x128xf32>
    %304 = arith.addf %302, %303 : vector<8x128xf32>
    %305 = math.tanh %304 : vector<8x128xf32>
    %306 = arith.mulf %301, %305 : vector<8x128xf32>
    %c8_i32_107 = arith.constant 8 : i32
    %c0_108 = arith.constant 0 : index
    %c0_109 = arith.constant 0 : index
    %307 = vector.load %arg5[%c0_108, %c0_109] : memref<128x128xf32, #tpu.memory_space<vmem>>, vector<128x128xf32>
    %cst_110 = arith.constant dense<0.000000e+00> : vector<8x128xf32>
    %308 = tpu.matmul %306, %307, %cst_110 {dimension_numbers = #tpu.dot_dimension_numbers<[1], [0], [0], [1], [0, 0, 1, 1], [], []>} : vector<8x128xf32>, vector<128x128xf32>, vector<8x128xf32> -> vector<8x128xf32>
    %c0_111 = arith.constant 0 : index
    %c0_112 = arith.constant 0 : index
    %309 = vector.load %arg6[%c0_111, %c0_112] : memref<1x128xf32, #tpu.memory_space<vmem>>, vector<1x128xf32>
    %310 = vector.broadcast %309 : vector<1x128xf32> to vector<8x128xf32>
    %311 = arith.addf %308, %310 : vector<8x128xf32>
    %c0_113 = arith.constant 0 : index
    %c0_114 = arith.constant 0 : index
    %312 = vector.load %arg7[%c0_113, %c0_114] : memref<8x128xf32, #tpu.memory_space<vmem>>, vector<8x128xf32>
    tpu.vector_store %arg7[%c0_113, %c0_114], %311 {strides = array<i32>} : memref<8x128xf32, #tpu.memory_space<vmem>>, vector<8x128xf32>,
    return
  }
  func.func @transform_0(%arg0: i32) -> (i32, i32, i32) {
    %c0_i32 = arith.constant 0 : i32
    %c0_i32_0 = arith.constant 0 : i32
    %c0_i32_1 = arith.constant 0 : i32
    return %arg0, %c0_i32, %c0_i32_0 : i32, i32, i32
  }
  func.func @transform_1(%arg0: i32) -> (i32, i32) {
    %c0_i32 = arith.constant 0 : i32
    %c0_i32_0 = arith.constant 0 : i32
    %c0_i32_1 = arith.constant 0 : i32
    return %c0_i32, %c0_i32_0 : i32, i32
  }
  func.func @transform_2(%arg0: i32) -> (i32, i32) {
    %c0_i32 = arith.constant 0 : i32
    %c0_i32_0 = arith.constant 0 : i32
    %c0_i32_1 = arith.constant 0 : i32
    return %c0_i32, %c0_i32_0 : i32, i32
  }
  func.func @transform_3(%arg0: i32) -> (i32, i32) {
    %c0_i32 = arith.constant 0 : i32
    %c0_i32_0 = arith.constant 0 : i32
    %c0_i32_1 = arith.constant 0 : i32
    return %c0_i32, %c0_i32_0 : i32, i32
  }
  func.func @transform_4(%arg0: i32) -> (i32, i32) {
    %c0_i32 = arith.constant 0 : i32
    %c0_i32_0 = arith.constant 0 : i32
    %c0_i32_1 = arith.constant 0 : i32
    return %c0_i32, %c0_i32_0 : i32, i32
  }
  func.func @transform_5(%arg0: i32) -> (i32, i32) {
    %c0_i32 = arith.constant 0 : i32
    %c0_i32_0 = arith.constant 0 : i32
    %c0_i32_1 = arith.constant 0 : i32
    return %c0_i32, %c0_i32_0 : i32, i32
  }
  func.func @transform_6(%arg0: i32) -> (i32, i32) {
    %c0_i32 = arith.constant 0 : i32
    %c0_i32_0 = arith.constant 0 : i32
    return %arg0, %c0_i32 : i32, i32
  }
}

</mosaic_0001>

<llo_original>
// kernel: tpu_custom_call.1
$region0: #{tpu_custom_call.1}
  #allocation0 [shape = 'u32[]', space=smem, size = 0x4, offset = 0x4, fixed_abs, tag = 'smem constant byte address 0x4 - core index']
  #allocation1 [shape = 'u32[144,128]{1,0:T(1,128)}', space=vmem, size = 0x12000, scoped, tag = 'internal scratch']
  #allocation2 [shape = 'f32[64,512]{1,0:T(8,128)}', space=vmem, size = 0x20000, scoped, tag = 'scratch operand']
  %s0 = inlined_call_operand.vmem [shape: f32[1,64,16], index: 0, kind: input, shape index: {}]
  %s1 = inlined_call_operand.vmem [shape: f32[16,512], index: 1, kind: input, shape index: {}]
  %s2 = inlined_call_operand.hbm [shape: f32[128,512], index: 2, kind: input, shape index: {}]
  %s3 = inlined_call_operand.vmem [shape: f32[1,512], index: 3, kind: input, shape index: {}]
  %s4 = inlined_call_operand.hbm [shape: f32[128,128], index: 4, kind: input, shape index: {}]
  %s5 = inlined_call_operand.vmem [shape: f32[1,128], index: 5, kind: input, shape index: {}]
  %s6 = inlined_call_operand.hbm [shape: f32[8,128], index: 6, kind: output, shape index: {}]
  %s7 = sld [smem:[#allocation0]]
  $region42: #{tpu_custom_call.1} parent=0
    _
  %s9 = ssub.s32 1, %s7
  %s10 = scalar_select 0, %s9, %s7
  $region1: #{tpu_custom_call.1} parent=0
    #allocation3 [shape = 'u8[262144]{0}', space=vmem, size = 0x40000, scoped, tag = 'input window, operand 2, single buffered']
    #allocation4 [shape = 's32[1]{0}', space=sflag, size = 0x4, scoped, tag = 'scoped memory for tpu_custom_call.1']
    #allocation5 [shape = 's32[1]{0}', space=sflag, size = 0x4, scoped, tag = 'scoped memory for tpu_custom_call.1']
    #allocation6 [shape = 'u8[65536]{0}', space=vmem, size = 0x10000, scoped, tag = 'input window, operand 4, single buffered']
    #allocation7 [shape = 's32[1]{0}', space=sflag, size = 0x4, scoped, tag = 'scoped memory for tpu_custom_call.1']
    #allocation8 [shape = 'u8[4096]{0}', space=vmem, size = 0x1000, scoped, tag = 'output window, operand 0, single buffered']
    %11 = vsyncpa [#allocation4], 0
    %12 = vsyncpa [#allocation7], 0
    %13 = vsyncpa [#allocation5], 0
    // Predicated region
    $region2: #{tpu_custom_call.1} parent=1 // pred_check
      _
    $region3: #{tpu_custom_call.1} parent=1 // pred_check_branch
      %15 = sbr.rel (0) target = $region5
    $region4: #{tpu_custom_call.1} parent=1 // pred_region
      _
    $region5: #{tpu_custom_call.1} parent=1 // pred_fallthru
      _
    // Predicated region
    $region6: #{tpu_custom_call.1} parent=1 // pred_check
      _
    $region7: #{tpu_custom_call.1} parent=1 // pred_check_branch
      %17 = sbr.rel (0) target = $region9
    $region8: #{tpu_custom_call.1} parent=1 // pred_region
      _
    $region9: #{tpu_custom_call.1} parent=1 // pred_fallthru
      _
    // Predicated region
    $region10: #{tpu_custom_call.1} parent=1 // pred_check
      _
    $region11: #{tpu_custom_call.1} parent=1 // pred_check_branch
      %19 = sbr.rel (0) target = $region13
    $region12: #{tpu_custom_call.1} parent=1 // pred_region
      %s21 = ssub.s32 8192, 8192
      %22 = vsyncadd [#allocation4], %s21
      %s23 = sshll.u32 [#allocation3], 4
      %s24 = int_to_ptr.vmem [resolvable:$true] %s23
      %29 = dma.hbm_to_vmem [thread:$0]  %s2, 8192, %s24, [#allocation4], 512, 512, 32
    $region13: #{tpu_custom_call.1} parent=1 // pred_fallthru
      _
    // Predicated region
    $region14: #{tpu_custom_call.1} parent=1 // pred_check
      _
    $region15: #{tpu_custom_call.1} parent=1 // pred_check_branch
      %31 = sbr.rel (0) target = $region17
    $region16: #{tpu_custom_call.1} parent=1 // pred_region
      _
    $region17: #{tpu_custom_call.1} parent=1 // pred_fallthru
      _
    // Predicated region
    $region18: #{tpu_custom_call.1} parent=1 // pred_check
      _
    $region19: #{tpu_custom_call.1} parent=1 // pred_check_branch
      %33 = sbr.rel (0) target = $region21
    $region20: #{tpu_custom_call.1} parent=1 // pred_region
      %s35 = ssub.s32 2048, 2048
      %36 = vsyncadd [#allocation7], %s35
      %s37 = sshll.u32 [#allocation6], 4
      %s38 = int_to_ptr.vmem [resolvable:$true] %s37
      %43 = dma.hbm_to_vmem [thread:$0]  %s4, 2048, %s38, [#allocation7], 128, 128, 8
    $region21: #{tpu_custom_call.1} parent=1 // pred_fallthru
      _
    // Predicated region
    $region22: #{tpu_custom_call.1} parent=1 // pred_check
      _
    $region23: #{tpu_custom_call.1} parent=1 // pred_check_branch
      %45 = sbr.rel (0) target = $region25
    $region24: #{tpu_custom_call.1} parent=1 // pred_region
      _
    $region25: #{tpu_custom_call.1} parent=1 // pred_fallthru
      _
    // Predicated region
    $region26: #{tpu_custom_call.1} parent=1 // pred_check
      _
    $region27: #{tpu_custom_call.1} parent=1 // pred_check_branch
      %47 = sbr.rel (0) target = $region29
    $region28: #{tpu_custom_call.1} parent=1 // pred_region
      %48 = dma.done [#allocation4], 8192
    $region29: #{tpu_custom_call.1} parent=1 // pred_fallthru
      _
    // Predicated region
    $region30: #{tpu_custom_call.1} parent=1 // pred_check
      _
    $region31: #{tpu_custom_call.1} parent=1 // pred_check_branch
      %50 = sbr.rel (0) target = $region33
    $region32: #{tpu_custom_call.1} parent=1 // pred_region
      %51 = dma.done [#allocation7], 2048
    $region33: #{tpu_custom_call.1} parent=1 // pred_fallthru
      _
    %v52 = vld [vmem:[%s0] sm:$0xff]
    %v53 = vld [vmem:[%s0 + $0x8] sm:$0xff]
    %v54 = vld [vmem:[%s0 + $0x10] sm:$0xff]
    %v55 = vld [vmem:[%s0 + $0x18] sm:$0xff]
    %v56 = vld [vmem:[%s0 + $0x20] sm:$0xff]
    %v57 = vld [vmem:[%s0 + $0x28] sm:$0xff]
    %v58 = vld [vmem:[%s0 + $0x30] sm:$0xff]
    %v59 = vld [vmem:[%s0 + $0x38] sm:$0xff]
    %v60 = vld [vmem:[%s1] sm:$0xff]
    %v61 = vld [vmem:[%s1 + $0x8] sm:$0xff]
    %v62 = vld [vmem:[%s1 + $0x10] sm:$0xff]
    %v63 = vld [vmem:[%s1 + $0x18] sm:$0xff]
    %v64 = vld [vmem:[%s1 + $0x20] sm:$0xff]
    %v65 = vld [vmem:[%s1 + $0x28] sm:$0xff]
    %v66 = vld [vmem:[%s1 + $0x30] sm:$0xff]
    %v67 = vld [vmem:[%s1 + $0x38] sm:$0xff]
    %v68 = vld [vmem:[%s3] sm:$0xf]
    %v70 = vlaneseq
    %v71 = vshrl.u32 %v70, 7
    %v72 = vsub.s32 0, %v71
    %v73 = vrot.slane %v68, %v72
    %v74 = vlaneseq
    %v75 = vshrl.u32 %v74, 7
    %v76 = vsub.s32 1, %v75
    %v77 = vrot.slane %v68, %v76
    %v78 = vlaneseq
    %v79 = vshrl.u32 %v78, 7
    %v80 = vsub.s32 2, %v79
    %v81 = vrot.slane %v68, %v80
    %v82 = vlaneseq
    %v83 = vshrl.u32 %v82, 7
    %v84 = vsub.s32 3, %v83
    %v85 = vrot.slane %v68, %v84
    %vm90 = vcmask 130048
    %v92 = vsel %vm90, %v52, 0
    %v95 = vsel %vm90, %v53, 0
    %v98 = vsel %vm90, %v54, 0
    %v101 = vsel %vm90, %v55, 0
    %v104 = vsel %vm90, %v56, 0
    %v107 = vsel %vm90, %v57, 0
    %v110 = vsel %vm90, %v58, 0
    %v113 = vsel %vm90, %v59, 0
    %115 = vmatprep.subr.mxu0 0.0
    %116 = vmatpush1.msra.mxu0 0.0
    %117 = vmatprep.subr.mxu0 0.0
    %118 = vmatpush1.msra.mxu0 0.0
    %119 = vmatprep.subr.mxu0 0.0
    %120 = vmatpush1.msra.mxu0 0.0
    %121 = vmatprep.subr.mxu0 0.0
    %122 = vmatpush1.msra.mxu0 0.0
    %123 = vmatprep.subr.mxu0 0.0
    %124 = vmatpush1.msra.mxu0 0.0
    %125 = vmatprep.subr.mxu0 0.0
    %126 = vmatpush1.msra.mxu0 0.0
    %127 = vmatprep.subr.mxu0 0.0
    %128 = vmatpush1.msra.mxu0 0.0
    %129 = vmatprep.subr.mxu0 0.0
    %130 = vmatpush1.msra.mxu0 0.0
    %131 = vmatprep.subr.mxu0 0.0
    %132 = vmatpush1.msra.mxu0 0.0
    %133 = vmatprep.subr.mxu0 0.0
    %134 = vmatpush1.msra.mxu0 0.0
    %135 = vmatprep.subr.mxu0 0.0
    %136 = vmatpush1.msra.mxu0 0.0
    %137 = vmatprep.subr.mxu0 0.0
    %138 = vmatpush1.msra.mxu0 0.0
    %139 = vmatprep.subr.mxu0 0.0
    %140 = vmatpush1.msra.mxu0 0.0
    %141 = vmatprep.subr.mxu0 0.0
    %142 = vmatpush1.msra.mxu0 0.0
    %143 = vmatprep.subr.mxu0 %v65
    %144 = vmatpush1.msra.mxu0 %v64
    %145 = vmatprep.subr.mxu0 %v61
    %146 = vmatpush1.msra.mxu0 %v60
    %147 = vmatprep.subr.mxu0 0.0
    %148 = vmatpush2.msra.mxu0 0.0
    %149 = vmatprep.subr.mxu0 0.0
    %150 = vmatpush2.msra.mxu0 0.0
    %151 = vmatprep.subr.mxu0 0.0
    %152 = vmatpush2.msra.mxu0 0.0
    %153 = vmatprep.subr.mxu0 0.0
    %154 = vmatpush2.msra.mxu0 0.0
    %155 = vmatprep.subr.mxu0 0.0
    %156 = vmatpush2.msra.mxu0 0.0
    %157 = vmatprep.subr.mxu0 0.0
    %158 = vmatpush2.msra.mxu0 0.0
    %159 = vmatprep.subr.mxu0 0.0
    %160 = vmatpush2.msra.mxu0 0.0
    %161 = vmatprep.subr.mxu0 0.0
    %162 = vmatpush2.msra.mxu0 0.0
    %163 = vmatprep.subr.mxu0 0.0
    %164 = vmatpush2.msra.mxu0 0.0
    %165 = vmatprep.subr.mxu0 0.0
    %166 = vmatpush2.msra.mxu0 0.0
    %167 = vmatprep.subr.mxu0 0.0
    %168 = vmatpush2.msra.mxu0 0.0
    %169 = vmatprep.subr.mxu0 0.0
    %170 = vmatpush2.msra.mxu0 0.0
    %171 = vmatprep.subr.mxu0 0.0
    %172 = vmatpush2.msra.mxu0 0.0
    %173 = vmatprep.subr.mxu0 0.0
    %174 = vmatpush2.msra.mxu0 0.0
    %175 = vmatprep.subr.mxu0 0.0
    %176 = vmatpush2.msra.mxu0 0.0
    %177 = vmatprep.subr.mxu0 0.0
    %178 = vmatpush2.msra.mxu0 0.0
    %179 = vmatprep.mubr.f32.mxu0 0.0
    %180 = vmatmul.mubr.f32.gmra.mxu0 %v92
    %v181 = vpop.f32.mrf.mxu0
    %v182 = vadd.f32 %v73, %v181
    %v183 = vpop.f32.mrf.mxu0
    %v184 = vadd.f32 %v77, %v183
    %185 = vmatprep.mubr.f32.mxu0 0.0
    %186 = vmatmul.mubr.f32.gmra.mxu0 %v95
    %v187 = vpop.f32.mrf.mxu0
    %v188 = vadd.f32 %v73, %v187
    %v189 = vpop.f32.mrf.mxu0
    %v190 = vadd.f32 %v77, %v189
    %191 = vmatprep.mubr.f32.mxu0 0.0
    %192 = vmatmul.mubr.f32.gmra.mxu0 %v98
    %v193 = vpop.f32.mrf.mxu0
    %v194 = vadd.f32 %v73, %v193
    %v195 = vpop.f32.mrf.mxu0
    %v196 = vadd.f32 %v77, %v195
    %197 = vmatprep.mubr.f32.mxu0 0.0
    %198 = vmatmul.mubr.f32.gmra.mxu0 %v101
    %v199 = vpop.f32.mrf.mxu0
    %v200 = vadd.f32 %v73, %v199
    %v201 = vpop.f32.mrf.mxu0
    %v202 = vadd.f32 %v77, %v201
    %203 = vmatprep.mubr.f32.mxu0 0.0
    %204 = vmatmul.mubr.f32.gmra.mxu0 %v104
    %v205 = vpop.f32.mrf.mxu0
    %v206 = vadd.f32 %v73, %v205
    %v207 = vpop.f32.mrf.mxu0
    %v208 = vadd.f32 %v77, %v207
    %209 = vmatprep.mubr.f32.mxu0 0.0
    %210 = vmatmul.mubr.f32.gmra.mxu0 %v107
    %v211 = vpop.f32.mrf.mxu0
    %v212 = vadd.f32 %v73, %v211
    %v213 = vpop.f32.mrf.mxu0
    %v214 = vadd.f32 %v77, %v213
    %215 = vmatprep.mubr.f32.mxu0 0.0
    %216 = vmatmul.mubr.f32.gmra.mxu0 %v110
    %v217 = vpop.f32.mrf.mxu0
    %v218 = vadd.f32 %v73, %v217
    %v219 = vpop.f32.mrf.mxu0
    %v220 = vadd.f32 %v77, %v219
    %221 = vmatprep.mubr.f32.mxu0 0.0
    %222 = vmatmul.mubr.f32.gmra.mxu0 %v113
    %v223 = vpop.f32.mrf.mxu0
    %v224 = vadd.f32 %v73, %v223
    %v225 = vpop.f32.mrf.mxu0
    %v226 = vadd.f32 %v77, %v225
    %227 = vdwg.mxu0
    %228 = vmatprep.subr.mxu0 0.0
    %229 = vmatpush1.msra.mxu0 0.0
    %230 = vmatprep.subr.mxu0 0.0
    %231 = vmatpush1.msra.mxu0 0.0
    %232 = vmatprep.subr.mxu0 0.0
    %233 = vmatpush1.msra.mxu0 0.0
    %234 = vmatprep.subr.mxu0 0.0
    %235 = vmatpush1.msra.mxu0 0.0
    %236 = vmatprep.subr.mxu0 0.0
    %237 = vmatpush1.msra.mxu0 0.0
    %238 = vmatprep.subr.mxu0 0.0
    %239 = vmatpush1.msra.mxu0 0.0
    %240 = vmatprep.subr.mxu0 0.0
    %241 = vmatpush1.msra.mxu0 0.0
    %242 = vmatprep.subr.mxu0 0.0
    %243 = vmatpush1.msra.mxu0 0.0
    %244 = vmatprep.subr.mxu0 0.0
    %245 = vmatpush1.msra.mxu0 0.0
    %246 = vmatprep.subr.mxu0 0.0
    %247 = vmatpush1.msra.mxu0 0.0
    %248 = vmatprep.subr.mxu0 0.0
    %249 = vmatpush1.msra.mxu0 0.0
    %250 = vmatprep.subr.mxu0 0.0
    %251 = vmatpush1.msra.mxu0 0.0
    %252 = vmatprep.subr.mxu0 0.0
    %253 = vmatpush1.msra.mxu0 0.0
    %254 = vmatprep.subr.mxu0 0.0
    %255 = vmatpush1.msra.mxu0 0.0
    %256 = vmatprep.subr.mxu0 %v67
    %257 = vmatpush1.msra.mxu0 %v66
    %258 = vmatprep.subr.mxu0 %v63
    %259 = vmatpush1.msra.mxu0 %v62
    %260 = vmatprep.subr.mxu0 0.0
    %261 = vmatpush2.msra.mxu0 0.0
    %262 = vmatprep.subr.mxu0 0.0
    %263 = vmatpush2.msra.mxu0 0.0
    %264 = vmatprep.subr.mxu0 0.0
    %265 = vmatpush2.msra.mxu0 0.0
    %266 = vmatprep.subr.mxu0 0.0
    %267 = vmatpush2.msra.mxu0 0.0
    %268 = vmatprep.subr.mxu0 0.0
    %269 = vmatpush2.msra.mxu0 0.0
    %270 = vmatprep.subr.mxu0 0.0
    %271 = vmatpush2.msra.mxu0 0.0
    %272 = vmatprep.subr.mxu0 0.0
    %273 = vmatpush2.msra.mxu0 0.0
    %274 = vmatprep.subr.mxu0 0.0
    %275 = vmatpush2.msra.mxu0 0.0
    %276 = vmatprep.subr.mxu0 0.0
    %277 = vmatpush2.msra.mxu0 0.0
    %278 = vmatprep.subr.mxu0 0.0
    %279 = vmatpush2.msra.mxu0 0.0
    %280 = vmatprep.subr.mxu0 0.0
    %281 = vmatpush2.msra.mxu0 0.0
    %282 = vmatprep.subr.mxu0 0.0
    %283 = vmatpush2.msra.mxu0 0.0
    %284 = vmatprep.subr.mxu0 0.0
    %285 = vmatpush2.msra.mxu0 0.0
    %286 = vmatprep.subr.mxu0 0.0
    %287 = vmatpush2.msra.mxu0 0.0
    %288 = vmatprep.subr.mxu0 0.0
    %289 = vmatpush2.msra.mxu0 0.0
    %290 = vmatprep.subr.mxu0 0.0
    %291 = vmatpush2.msra.mxu0 0.0
    %292 = vmatprep.mubr.f32.mxu0 0.0
    %293 = vmatmul.mubr.f32.gmra.mxu0 %v92
    %v294 = vpop.f32.mrf.mxu0
    %v295 = vadd.f32 %v81, %v294
    %v296 = vpop.f32.mrf.mxu0
    %v297 = vadd.f32 %v85, %v296
    %298 = vmatprep.mubr.f32.mxu0 0.0
    %299 = vmatmul.mubr.f32.gmra.mxu0 %v95
    %v300 = vpop.f32.mrf.mxu0
    %v301 = vadd.f32 %v81, %v300
    %v302 = vpop.f32.mrf.mxu0
    %v303 = vadd.f32 %v85, %v302
    %304 = vmatprep.mubr.f32.mxu0 0.0
    %305 = vmatmul.mubr.f32.gmra.mxu0 %v98
    %v306 = vpop.f32.mrf.mxu0
    %v307 = vadd.f32 %v81, %v306
    %v308 = vpop.f32.mrf.mxu0
    %v309 = vadd.f32 %v85, %v308
    %310 = vmatprep.mubr.f32.mxu0 0.0
    %311 = vmatmul.mubr.f32.gmra.mxu0 %v101
    %v312 = vpop.f32.mrf.mxu0
    %v313 = vadd.f32 %v81, %v312
    %v314 = vpop.f32.mrf.mxu0
    %v315 = vadd.f32 %v85, %v314
    %316 = vmatprep.mubr.f32.mxu0 0.0
    %317 = vmatmul.mubr.f32.gmra.mxu0 %v104
    %v318 = vpop.f32.mrf.mxu0
    %v319 = vadd.f32 %v81, %v318
    %v320 = vpop.f32.mrf.mxu0
    %v321 = vadd.f32 %v85, %v320
    %322 = vmatprep.mubr.f32.mxu0 0.0
    %323 = vmatmul.mubr.f32.gmra.mxu0 %v107
    %v324 = vpop.f32.mrf.mxu0
    %v325 = vadd.f32 %v81, %v324
    %v326 = vpop.f32.mrf.mxu0
    %v327 = vadd.f32 %v85, %v326
    %328 = vmatprep.mubr.f32.mxu0 0.0
    %329 = vmatmul.mubr.f32.gmra.mxu0 %v110
    %v330 = vpop.f32.mrf.mxu0
    %v331 = vadd.f32 %v81, %v330
    %v332 = vpop.f32.mrf.mxu0
    %v333 = vadd.f32 %v85, %v332
    %334 = vmatprep.mubr.f32.mxu0 0.0
    %335 = vmatmul.mubr.f32.gmra.mxu0 %v113
    %v336 = vpop.f32.mrf.mxu0
    %v337 = vadd.f32 %v81, %v336
    %v338 = vpop.f32.mrf.mxu0
    %v339 = vadd.f32 %v85, %v338
    %340 = vdwg.mxu0
    %341 = vst [vmem:[#allocation2] sm:$0xff] %v182
    %342 = vst [vmem:[#allocation2 + $0x8] sm:$0xff] %v184
    %343 = vst [vmem:[#allocation2 + $0x10] sm:$0xff] %v295
    %344 = vst [vmem:[#allocation2 + $0x18] sm:$0xff] %v297
    %345 = vst [vmem:[#allocation2 + $0x20] sm:$0xff] %v188
    %346 = vst [vmem:[#allocation2 + $0x28] sm:$0xff] %v190
    %347 = vst [vmem:[#allocation2 + $0x30] sm:$0xff] %v301
    %348 = vst [vmem:[#allocation2 + $0x38] sm:$0xff] %v303
    %349 = vst [vmem:[#allocation2 + $0x40] sm:$0xff] %v194
    %350 = vst [vmem:[#allocation2 + $0x48] sm:$0xff] %v196
    %351 = vst [vmem:[#allocation2 + $0x50] sm:$0xff] %v307
    %352 = vst [vmem:[#allocation2 + $0x58] sm:$0xff] %v309
    %353 = vst [vmem:[#allocation2 + $0x60] sm:$0xff] %v200
    %354 = vst [vmem:[#allocation2 + $0x68] sm:$0xff] %v202
    %355 = vst [vmem:[#allocation2 + $0x70] sm:$0xff] %v313
    %356 = vst [vmem:[#allocation2 + $0x78] sm:$0xff] %v315
    %357 = vst [vmem:[#allocation2 + $0x80] sm:$0xff] %v206
    %358 = vst [vmem:[#allocation2 + $0x88] sm:$0xff] %v208
    %359 = vst [vmem:[#allocation2 + $0x90] sm:$0xff] %v319
    %360 = vst [vmem:[#allocation2 + $0x98] sm:$0xff] %v321
    %361 = vst [vmem:[#allocation2 + $0xa0] sm:$0xff] %v212
    %362 = vst [vmem:[#allocation2 + $0xa8] sm:$0xff] %v214
    %363 = vst [vmem:[#allocation2 + $0xb0] sm:$0xff] %v325
    %364 = vst [vmem:[#allocation2 + $0xb8] sm:$0xff] %v327
    %365 = vst [vmem:[#allocation2 + $0xc0] sm:$0xff] %v218
    %366 = vst [vmem:[#allocation2 + $0xc8] sm:$0xff] %v220
    %367 = vst [vmem:[#allocation2 + $0xd0] sm:$0xff] %v331
    %368 = vst [vmem:[#allocation2 + $0xd8] sm:$0xff] %v333
    %369 = vst [vmem:[#allocation2 + $0xe0] sm:$0xff] %v224
    %370 = vst [vmem:[#allocation2 + $0xe8] sm:$0xff] %v226
    %371 = vst [vmem:[#allocation2 + $0xf0] sm:$0xff] %v337
    %372 = vst [vmem:[#allocation2 + $0xf8] sm:$0xff] %v339
    %v373 = vld [vmem:[#allocation3] sm:$0xff]
    %v374 = vld [vmem:[#allocation3 + $0x8] sm:$0xff]
    %v375 = vld [vmem:[#allocation3 + $0x10] sm:$0xff]
    %v376 = vld [vmem:[#allocation3 + $0x18] sm:$0xff]
    %v377 = vld [vmem:[#allocation3 + $0x20] sm:$0xff]
    %v378 = vld [vmem:[#allocation3 + $0x28] sm:$0xff]
    %v379 = vld [vmem:[#allocation3 + $0x30] sm:$0xff]
    %v380 = vld [vmem:[#allocation3 + $0x38] sm:$0xff]
    %v381 = vld [vmem:[#allocation3 + $0x40] sm:$0xff]
    %v382 = vld [vmem:[#allocation3 + $0x48] sm:$0xff]
    %v383 = vld [vmem:[#allocation3 + $0x50] sm:$0xff]
    %v384 = vld [vmem:[#allocation3 + $0x58] sm:$0xff]
    %v385 = vld [vmem:[#allocation3 + $0x60] sm:$0xff]
    %v386 = vld [vmem:[#allocation3 + $0x68] sm:$0xff]
    %v387 = vld [vmem:[#allocation3 + $0x70] sm:$0xff]
    %v388 = vld [vmem:[#allocation3 + $0x78] sm:$0xff]
    %v389 = vld [vmem:[#allocation3 + $0x80] sm:$0xff]
    %v390 = vld [vmem:[#allocation3 + $0x88] sm:$0xff]
    %v391 = vld [vmem:[#allocation3 + $0x90] sm:$0xff]
    %v392 = vld [vmem:[#allocation3 + $0x98] sm:$0xff]
    %v393 = vld [vmem:[#allocation3 + $0xa0] sm:$0xff]
    %v394 = vld [vmem:[#allocation3 + $0xa8] sm:$0xff]
    %v395 = vld [vmem:[#allocation3 + $0xb0] sm:$0xff]
    %v396 = vld [vmem:[#allocation3 + $0xb8] sm:$0xff]
    %v397 = vld [vmem:[#allocation3 + $0xc0] sm:$0xff]
    %v398 = vld [vmem:[#allocation3 + $0xc8] sm:$0xff]
    %v399 = vld [vmem:[#allocation3 + $0xd0] sm:$0xff]
    %v400 = vld [vmem:[#allocation3 + $0xd8] sm:$0xff]
    %v401 = vld [vmem:[#allocation3 + $0xe0] sm:$0xff]
    %v402 = vld [vmem:[#allocation3 + $0xe8] sm:$0xff]
    %v403 = vld [vmem:[#allocation3 + $0xf0] sm:$0xff]
    %v404 = vld [vmem:[#allocation3 + $0xf8] sm:$0xff]
    %v405 = vld [vmem:[#allocation3 + $0x100] sm:$0xff]
    %v406 = vld [vmem:[#allocation3 + $0x108] sm:$0xff]
    %v407 = vld [vmem:[#allocation3 + $0x110] sm:$0xff]
    %v408 = vld [vmem:[#allocation3 + $0x118] sm:$0xff]
    %v409 = vld [vmem:[#allocation3 + $0x120] sm:$0xff]
    %v410 = vld [vmem:[#allocation3 + $0x128] sm:$0xff]
    %v411 = vld [vmem:[#allocation3 + $0x130] sm:$0xff]
    %v412 = vld [vmem:[#allocation3 + $0x138] sm:$0xff]
    %v413 = vld [vmem:[#allocation3 + $0x140] sm:$0xff]
    %v414 = vld [vmem:[#allocation3 + $0x148] sm:$0xff]
    %v415 = vld [vmem:[#allocation3 + $0x150] sm:$0xff]
    %v416 = vld [vmem:[#allocation3 + $0x158] sm:$0xff]
    %v417 = vld [vmem:[#allocation3 + $0x160] sm:$0xff]
    %v418 = vld [vmem:[#allocation3 + $0x168] sm:$0xff]
    %v419 = vld [vmem:[#allocation3 + $0x170] sm:$0xff]
    %v420 = vld [vmem:[#allocation3 + $0x178] sm:$0xff]
    %v421 = vld [vmem:[#allocation3 + $0x180] sm:$0xff]
    %v422 = vld [vmem:[#allocation3 + $0x188] sm:$0xff]
    %v423 = vld [vmem:[#allocation3 + $0x190] sm:$0xff]
    %v424 = vld [vmem:[#allocation3 + $0x198] sm:$0xff]
    %v425 = vld [vmem:[#allocation3 + $0x1a0] sm:$0xff]
    %v426 = vld [vmem:[#allocation3 + $0x1a8] sm:$0xff]
    %v427 = vld [vmem:[#allocation3 + $0x1b0] sm:$0xff]
    %v428 = vld [vmem:[#allocation3 + $0x1b8] sm:$0xff]
    %v429 = vld [vmem:[#allocation3 + $0x1c0] sm:$0xff]
    %v430 = vld [vmem:[#allocation3 + $0x1c8] sm:$0xff]
    %v431 = vld [vmem:[#allocation3 + $0x1d0] sm:$0xff]
    %v432 = vld [vmem:[#allocation3 + $0x1d8] sm:$0xff]
    %v433 = vld [vmem:[#allocation3 + $0x1e0] sm:$0xff]
    %v434 = vld [vmem:[#allocation3 + $0x1e8] sm:$0xff]
    %v435 = vld [vmem:[#allocation3 + $0x1f0] sm:$0xff]
    %v436 = vld [vmem:[#allocation3 + $0x1f8] sm:$0xff]
    %s437 = smul.u32 0, 4
    %s438 = smul.addr %s437, 8
    %s439 = scalar_lea.vmem [#allocation2], %s438
    %v440 = vld [vmem:[%s439] sm:$0xff]
    %v441 = vld [vmem:[%s439 + $0x8] sm:$0xff]
    %v442 = vld [vmem:[%s439 + $0x10] sm:$0xff]
    %v443 = vld [vmem:[%s439 + $0x18] sm:$0xff]
    %444 = vmatprep.subr.mxu0 %v434
    %445 = vmatpush1.msra.mxu0 %v433
    %446 = vmatprep.subr.mxu0 %v430
    %447 = vmatpush1.msra.mxu0 %v429
    %448 = vmatprep.subr.mxu0 %v426
    %449 = vmatpush1.msra.mxu0 %v425
    %450 = vmatprep.subr.mxu0 %v422
    %451 = vmatpush1.msra.mxu0 %v421
    %452 = vmatprep.subr.mxu0 %v418
    %453 = vmatpush1.msra.mxu0 %v417
    %454 = vmatprep.subr.mxu0 %v414
    %455 = vmatpush1.msra.mxu0 %v413
    %456 = vmatprep.subr.mxu0 %v410
    %457 = vmatpush1.msra.mxu0 %v409
    %458 = vmatprep.subr.mxu0 %v406
    %459 = vmatpush1.msra.mxu0 %v405
    %460 = vmatprep.subr.mxu0 %v402
    %461 = vmatpush1.msra.mxu0 %v401
    %462 = vmatprep.subr.mxu0 %v398
    %463 = vmatpush1.msra.mxu0 %v397
    %464 = vmatprep.subr.mxu0 %v394
    %465 = vmatpush1.msra.mxu0 %v393
    %466 = vmatprep.subr.mxu0 %v390
    %467 = vmatpush1.msra.mxu0 %v389
    %468 = vmatprep.subr.mxu0 %v386
    %469 = vmatpush1.msra.mxu0 %v385
    %470 = vmatprep.subr.mxu0 %v382
    %471 = vmatpush1.msra.mxu0 %v381
    %472 = vmatprep.subr.mxu0 %v378
    %473 = vmatpush1.msra.mxu0 %v377
    %474 = vmatprep.subr.mxu0 %v374
    %475 = vmatpush1.msra.mxu0 %v373
    %476 = vmatprep.subr.mxu0 0.0
    %477 = vmatpush2.msra.mxu0 0.0
    %478 = vmatprep.subr.mxu0 0.0
    %479 = vmatpush2.msra.mxu0 0.0
    %480 = vmatprep.subr.mxu0 0.0
    %481 = vmatpush2.msra.mxu0 0.0
    %482 = vmatprep.subr.mxu0 0.0
    %483 = vmatpush2.msra.mxu0 0.0
    %484 = vmatprep.subr.mxu0 0.0
    %485 = vmatpush2.msra.mxu0 0.0
    %486 = vmatprep.subr.mxu0 0.0
    %487 = vmatpush2.msra.mxu0 0.0
    %488 = vmatprep.subr.mxu0 0.0
    %489 = vmatpush2.msra.mxu0 0.0
    %490 = vmatprep.subr.mxu0 0.0
    %491 = vmatpush2.msra.mxu0 0.0
    %492 = vmatprep.subr.mxu0 0.0
    %493 = vmatpush2.msra.mxu0 0.0
    %494 = vmatprep.subr.mxu0 0.0
    %495 = vmatpush2.msra.mxu0 0.0
    %496 = vmatprep.subr.mxu0 0.0
    %497 = vmatpush2.msra.mxu0 0.0
    %498 = vmatprep.subr.mxu0 0.0
    %499 = vmatpush2.msra.mxu0 0.0
    %500 = vmatprep.subr.mxu0 0.0
    %501 = vmatpush2.msra.mxu0 0.0
    %502 = vmatprep.subr.mxu0 0.0
    %503 = vmatpush2.msra.mxu0 0.0
    %504 = vmatprep.subr.mxu0 0.0
    %505 = vmatpush2.msra.mxu0 0.0
    %506 = vmatprep.subr.mxu0 0.0
    %507 = vmatpush2.msra.mxu0 0.0
    %508 = vmatprep.mubr.f32.mxu0 0.0
    %509 = vmatmul.mubr.f32.gmra.mxu0 0.0
    %v510 = vpop.f32.mrf.mxu0
    %v511 = vadd.f32 0.0, %v510
    %v512 = vpop.f32.mrf.mxu0
    %v513 = vadd.f32 0.0, %v512
    %514 = vdwg.mxu0
    %515 = vmatprep.subr.mxu0 %v436
    %516 = vmatpush1.msra.mxu0 %v435
    %517 = vmatprep.subr.mxu0 %v432
    %518 = vmatpush1.msra.mxu0 %v431
    %519 = vmatprep.subr.mxu0 %v428
    %520 = vmatpush1.msra.mxu0 %v427
    %521 = vmatprep.subr.mxu0 %v424
    %522 = vmatpush1.msra.mxu0 %v423
    %523 = vmatprep.subr.mxu0 %v420
    %524 = vmatpush1.msra.mxu0 %v419
    %525 = vmatprep.subr.mxu0 %v416
    %526 = vmatpush1.msra.mxu0 %v415
    %527 = vmatprep.subr.mxu0 %v412
    %528 = vmatpush1.msra.mxu0 %v411
    %529 = vmatprep.subr.mxu0 %v408
    %530 = vmatpush1.msra.mxu0 %v407
    %531 = vmatprep.subr.mxu0 %v404
    %532 = vmatpush1.msra.mxu0 %v403
    %533 = vmatprep.subr.mxu0 %v400
    %534 = vmatpush1.msra.mxu0 %v399
    %535 = vmatprep.subr.mxu0 %v396
    %536 = vmatpush1.msra.mxu0 %v395
    %537 = vmatprep.subr.mxu0 %v392
    %538 = vmatpush1.msra.mxu0 %v391
    %539 = vmatprep.subr.mxu0 %v388
    %540 = vmatpush1.msra.mxu0 %v387
    %541 = vmatprep.subr.mxu0 %v384
    %542 = vmatpush1.msra.mxu0 %v383
    %543 = vmatprep.subr.mxu0 %v380
    %544 = vmatpush1.msra.mxu0 %v379
    %545 = vmatprep.subr.mxu0 %v376
    %546 = vmatpush1.msra.mxu0 %v375
    %547 = vmatprep.subr.mxu0 0.0
    %548 = vmatpush2.msra.mxu0 0.0
    %549 = vmatprep.subr.mxu0 0.0
    %550 = vmatpush2.msra.mxu0 0.0
    %551 = vmatprep.subr.mxu0 0.0
    %552 = vmatpush2.msra.mxu0 0.0
    %553 = vmatprep.subr.mxu0 0.0
    %554 = vmatpush2.msra.mxu0 0.0
    %555 = vmatprep.subr.mxu0 0.0
    %556 = vmatpush2.msra.mxu0 0.0
    %557 = vmatprep.subr.mxu0 0.0
    %558 = vmatpush2.msra.mxu0 0.0
    %559 = vmatprep.subr.mxu0 0.0
    %560 = vmatpush2.msra.mxu0 0.0
    %561 = vmatprep.subr.mxu0 0.0
    %562 = vmatpush2.msra.mxu0 0.0
    %563 = vmatprep.subr.mxu0 0.0
    %564 = vmatpush2.msra.mxu0 0.0
    %565 = vmatprep.subr.mxu0 0.0
    %566 = vmatpush2.msra.mxu0 0.0
    %567 = vmatprep.subr.mxu0 0.0
    %568 = vmatpush2.msra.mxu0 0.0
    %569 = vmatprep.subr.mxu0 0.0
    %570 = vmatpush2.msra.mxu0 0.0
    %571 = vmatprep.subr.mxu0 0.0
    %572 = vmatpush2.msra.mxu0 0.0
    %573 = vmatprep.subr.mxu0 0.0
    %574 = vmatpush2.msra.mxu0 0.0
    %575 = vmatprep.subr.mxu0 0.0
    %576 = vmatpush2.msra.mxu0 0.0
    %577 = vmatprep.subr.mxu0 0.0
    %578 = vmatpush2.msra.mxu0 0.0
    %579 = vmatprep.mubr.f32.mxu0 0.0
    %580 = vmatmul.mubr.f32.gmra.mxu0 0.0
    %v581 = vpop.f32.mrf.mxu0
    %v582 = vadd.f32 0.0, %v581
    %v583 = vpop.f32.mrf.mxu0
    %v584 = vadd.f32 0.0, %v583
    %585 = vdwg.mxu0
    %v586 = vadd.f32 %v440, %v511
    %v587 = vadd.f32 %v441, %v513
    %v588 = vadd.f32 %v442, %v582
    %v589 = vadd.f32 %v443, %v584
    %v590 = vmul.f32 %v586, 0.5
    %v591 = vtanh.pop %v590
    %v592 = vmul.f32 %v591, 0.5
    %v593 = vadd.f32 %v592, 0.5
    %v594 = vmul.f32 %v587, 0.5
    %v595 = vtanh.pop %v594
    %v596 = vmul.f32 %v595, 0.5
    %v597 = vadd.f32 %v596, 0.5
    %v598 = vtanh.pop %v588
    %v599 = vmul.f32 %v589, 0.5
    %v600 = vtanh.pop %v599
    %v601 = vmul.f32 %v600, 0.5
    %v602 = vadd.f32 %v601, 0.5
    %v603 = vmul.f32 %v597, 0.0
    %v604 = vmul.f32 %v593, %v598
    %v605 = vadd.f32 %v603, %v604
    %v606 = vtanh.pop %v605
    %v607 = vmul.f32 %v602, %v606
    %s608 = smul.u32 1, 4
    %s609 = smul.addr %s608, 8
    %s610 = scalar_lea.vmem [#allocation2], %s609
    %v611 = vld [vmem:[%s610] sm:$0xff]
    %v612 = vld [vmem:[%s610 + $0x8] sm:$0xff]
    %v613 = vld [vmem:[%s610 + $0x10] sm:$0xff]
    %v614 = vld [vmem:[%s610 + $0x18] sm:$0xff]
    %615 = vmatprep.subr.mxu0 %v434
    %616 = vmatpush1.msra.mxu0 %v433
    %617 = vmatprep.subr.mxu0 %v430
    %618 = vmatpush1.msra.mxu0 %v429
    %619 = vmatprep.subr.mxu0 %v426
    %620 = vmatpush1.msra.mxu0 %v425
    %621 = vmatprep.subr.mxu0 %v422
    %622 = vmatpush1.msra.mxu0 %v421
    %623 = vmatprep.subr.mxu0 %v418
    %624 = vmatpush1.msra.mxu0 %v417
    %625 = vmatprep.subr.mxu0 %v414
    %626 = vmatpush1.msra.mxu0 %v413
    %627 = vmatprep.subr.mxu0 %v410
    %628 = vmatpush1.msra.mxu0 %v409
    %629 = vmatprep.subr.mxu0 %v406
    %630 = vmatpush1.msra.mxu0 %v405
    %631 = vmatprep.subr.mxu0 %v402
    %632 = vmatpush1.msra.mxu0 %v401
    %633 = vmatprep.subr.mxu0 %v398
    %634 = vmatpush1.msra.mxu0 %v397
    %635 = vmatprep.subr.mxu0 %v394
    %636 = vmatpush1.msra.mxu0 %v393
    %637 = vmatprep.subr.mxu0 %v390
    %638 = vmatpush1.msra.mxu0 %v389
    %639 = vmatprep.subr.mxu0 %v386
    %640 = vmatpush1.msra.mxu0 %v385
    %641 = vmatprep.subr.mxu0 %v382
    %642 = vmatpush1.msra.mxu0 %v381
    %643 = vmatprep.subr.mxu0 %v378
    %644 = vmatpush1.msra.mxu0 %v377
    %645 = vmatprep.subr.mxu0 %v374
    %646 = vmatpush1.msra.mxu0 %v373
    %647 = vmatprep.subr.mxu0 0.0
    %648 = vmatpush2.msra.mxu0 0.0
    %649 = vmatprep.subr.mxu0 0.0
    %650 = vmatpush2.msra.mxu0 0.0
    %651 = vmatprep.subr.mxu0 0.0
    %652 = vmatpush2.msra.mxu0 0.0
    %653 = vmatprep.subr.mxu0 0.0
    %654 = vmatpush2.msra.mxu0 0.0
    %655 = vmatprep.subr.mxu0 0.0
    %656 = vmatpush2.msra.mxu0 0.0
    %657 = vmatprep.subr.mxu0 0.0
    %658 = vmatpush2.msra.mxu0 0.0
    %659 = vmatprep.subr.mxu0 0.0
    %660 = vmatpush2.msra.mxu0 0.0
    %661 = vmatprep.subr.mxu0 0.0
    %662 = vmatpush2.msra.mxu0 0.0
    %663 = vmatprep.subr.mxu0 0.0
    %664 = vmatpush2.msra.mxu0 0.0
    %665 = vmatprep.subr.mxu0 0.0
    %666 = vmatpush2.msra.mxu0 0.0
    %667 = vmatprep.subr.mxu0 0.0
    %668 = vmatpush2.msra.mxu0 0.0
    %669 = vmatprep.subr.mxu0 0.0
    %670 = vmatpush2.msra.mxu0 0.0
    %671 = vmatprep.subr.mxu0 0.0
    %672 = vmatpush2.msra.mxu0 0.0
    %673 = vmatprep.subr.mxu0 0.0
    %674 = vmatpush2.msra.mxu0 0.0
    %675 = vmatprep.subr.mxu0 0.0
    %676 = vmatpush2.msra.mxu0 0.0
    %677 = vmatprep.subr.mxu0 0.0
    %678 = vmatpush2.msra.mxu0 0.0
    %679 = vmatprep.mubr.f32.mxu0 0.0
    %680 = vmatmul.mubr.f32.gmra.mxu0 %v607
    %v681 = vpop.f32.mrf.mxu0
    %v682 = vadd.f32 0.0, %v681
    %v683 = vpop.f32.mrf.mxu0
    %v684 = vadd.f32 0.0, %v683
    %685 = vdwg.mxu0
    %686 = vmatprep.subr.mxu0 %v436
    %687 = vmatpush1.msra.mxu0 %v435
    %688 = vmatprep.subr.mxu0 %v432
    %689 = vmatpush1.msra.mxu0 %v431
    %690 = vmatprep.subr.mxu0 %v428
    %691 = vmatpush1.msra.mxu0 %v427
    %692 = vmatprep.subr.mxu0 %v424
    %693 = vmatpush1.msra.mxu0 %v423
    %694 = vmatprep.subr.mxu0 %v420
    %695 = vmatpush1.msra.mxu0 %v419
    %696 = vmatprep.subr.mxu0 %v416
    %697 = vmatpush1.msra.mxu0 %v415
    %698 = vmatprep.subr.mxu0 %v412
    %699 = vmatpush1.msra.mxu0 %v411
    %700 = vmatprep.subr.mxu0 %v408
    %701 = vmatpush1.msra.mxu0 %v407
    %702 = vmatprep.subr.mxu0 %v404
    %703 = vmatpush1.msra.mxu0 %v403
    %704 = vmatprep.subr.mxu0 %v400
    %705 = vmatpush1.msra.mxu0 %v399
    %706 = vmatprep.subr.mxu0 %v396
    %707 = vmatpush1.msra.mxu0 %v395
    %708 = vmatprep.subr.mxu0 %v392
    %709 = vmatpush1.msra.mxu0 %v391
    %710 = vmatprep.subr.mxu0 %v388
    %711 = vmatpush1.msra.mxu0 %v387
    %712 = vmatprep.subr.mxu0 %v384
    %713 = vmatpush1.msra.mxu0 %v383
    %714 = vmatprep.subr.mxu0 %v380
    %715 = vmatpush1.msra.mxu0 %v379
    %716 = vmatprep.subr.mxu0 %v376
    %717 = vmatpush1.msra.mxu0 %v375
    %718 = vmatprep.subr.mxu0 0.0
    %719 = vmatpush2.msra.mxu0 0.0
    %720 = vmatprep.subr.mxu0 0.0
    %721 = vmatpush2.msra.mxu0 0.0
    %722 = vmatprep.subr.mxu0 0.0
    %723 = vmatpush2.msra.mxu0 0.0
    %724 = vmatprep.subr.mxu0 0.0
    %725 = vmatpush2.msra.mxu0 0.0
    %726 = vmatprep.subr.mxu0 0.0
    %727 = vmatpush2.msra.mxu0 0.0
    %728 = vmatprep.subr.mxu0 0.0
    %729 = vmatpush2.msra.mxu0 0.0
    %730 = vmatprep.subr.mxu0 0.0
    %731 = vmatpush2.msra.mxu0 0.0
    %732 = vmatprep.subr.mxu0 0.0
    %733 = vmatpush2.msra.mxu0 0.0
    %734 = vmatprep.subr.mxu0 0.0
    %735 = vmatpush2.msra.mxu0 0.0
    %736 = vmatprep.subr.mxu0 0.0
    %737 = vmatpush2.msra.mxu0 0.0
    %738 = vmatprep.subr.mxu0 0.0
    %739 = vmatpush2.msra.mxu0 0.0
    %740 = vmatprep.subr.mxu0 0.0
    %741 = vmatpush2.msra.mxu0 0.0
    %742 = vmatprep.subr.mxu0 0.0
    %743 = vmatpush2.msra.mxu0 0.0
    %744 = vmatprep.subr.mxu0 0.0
    %745 = vmatpush2.msra.mxu0 0.0
    %746 = vmatprep.subr.mxu0 0.0
    %747 = vmatpush2.msra.mxu0 0.0
    %748 = vmatprep.subr.mxu0 0.0
    %749 = vmatpush2.msra.mxu0 0.0
    %750 = vmatprep.mubr.f32.mxu0 0.0
    %751 = vmatmul.mubr.f32.gmra.mxu0 %v607
    %v752 = vpop.f32.mrf.mxu0
    %v753 = vadd.f32 0.0, %v752
    %v754 = vpop.f32.mrf.mxu0
    %v755 = vadd.f32 0.0, %v754
    %756 = vdwg.mxu0
    %v757 = vadd.f32 %v611, %v682
    %v758 = vadd.f32 %v612, %v684
    %v759 = vadd.f32 %v613, %v753
    %v760 = vadd.f32 %v614, %v755
    %v761 = vmul.f32 %v757, 0.5
    %v762 = vtanh.pop %v761
    %v763 = vmul.f32 %v762, 0.5
    %v764 = vadd.f32 %v763, 0.5
    %v765 = vmul.f32 %v758, 0.5
    %v766 = vtanh.pop %v765
    %v767 = vmul.f32 %v766, 0.5
    %v768 = vadd.f32 %v767, 0.5
    %v769 = vtanh.pop %v759
    %v770 = vmul.f32 %v760, 0.5
    %v771 = vtanh.pop %v770
    %v772 = vmul.f32 %v771, 0.5
    %v773 = vadd.f32 %v772, 0.5
    %v774 = vmul.f32 %v768, %v605
    %v775 = vmul.f32 %v764, %v769
    %v776 = vadd.f32 %v774, %v775
    %v777 = vtanh.pop %v776
    %v778 = vmul.f32 %v773, %v777
    %s779 = smul.u32 2, 4
    %s780 = smul.addr %s779, 8
    %s781 = scalar_lea.vmem [#allocation2], %s780
    %v782 = vld [vmem:[%s781] sm:$0xff]
    %v783 = vld [vmem:[%s781 + $0x8] sm:$0xff]
    %v784 = vld [vmem:[%s781 + $0x10] sm:$0xff]
    %v785 = vld [vmem:[%s781 + $0x18] sm:$0xff]
    %786 = vmatprep.subr.mxu0 %v434
    %787 = vmatpush1.msra.mxu0 %v433
    %788 = vmatprep.subr.mxu0 %v430
    %789 = vmatpush1.msra.mxu0 %v429
    %790 = vmatprep.subr.mxu0 %v426
    %791 = vmatpush1.msra.mxu0 %v425
    %792 = vmatprep.subr.mxu0 %v422
    %793 = vmatpush1.msra.mxu0 %v421
    %794 = vmatprep.subr.mxu0 %v418
    %795 = vmatpush1.msra.mxu0 %v417
    %796 = vmatprep.subr.mxu0 %v414
    %797 = vmatpush1.msra.mxu0 %v413
    %798 = vmatprep.subr.mxu0 %v410
    %799 = vmatpush1.msra.mxu0 %v409
    %800 = vmatprep.subr.mxu0 %v406
    %801 = vmatpush1.msra.mxu0 %v405
    %802 = vmatprep.subr.mxu0 %v402
    %803 = vmatpush1.msra.mxu0 %v401
    %804 = vmatprep.subr.mxu0 %v398
    %805 = vmatpush1.msra.mxu0 %v397
    %806 = vmatprep.subr.mxu0 %v394
    %807 = vmatpush1.msra.mxu0 %v393
    %808 = vmatprep.subr.mxu0 %v390
    %809 = vmatpush1.msra.mxu0 %v389
    %810 = vmatprep.subr.mxu0 %v386
    %811 = vmatpush1.msra.mxu0 %v385
    %812 = vmatprep.subr.mxu0 %v382
    %813 = vmatpush1.msra.mxu0 %v381
    %814 = vmatprep.subr.mxu0 %v378
    %815 = vmatpush1.msra.mxu0 %v377
    %816 = vmatprep.subr.mxu0 %v374
    %817 = vmatpush1.msra.mxu0 %v373
    %818 = vmatprep.subr.mxu0 0.0
    %819 = vmatpush2.msra.mxu0 0.0
    %820 = vmatprep.subr.mxu0 0.0
    %821 = vmatpush2.msra.mxu0 0.0
    %822 = vmatprep.subr.mxu0 0.0
    %823 = vmatpush2.msra.mxu0 0.0
    %824 = vmatprep.subr.mxu0 0.0
    %825 = vmatpush2.msra.mxu0 0.0
    %826 = vmatprep.subr.mxu0 0.0
    %827 = vmatpush2.msra.mxu0 0.0
    %828 = vmatprep.subr.mxu0 0.0
    %829 = vmatpush2.msra.mxu0 0.0
    %830 = vmatprep.subr.mxu0 0.0
    %831 = vmatpush2.msra.mxu0 0.0
    %832 = vmatprep.subr.mxu0 0.0
    %833 = vmatpush2.msra.mxu0 0.0
    %834 = vmatprep.subr.mxu0 0.0
    %835 = vmatpush2.msra.mxu0 0.0
    %836 = vmatprep.subr.mxu0 0.0
    %837 = vmatpush2.msra.mxu0 0.0
    %838 = vmatprep.subr.mxu0 0.0
    %839 = vmatpush2.msra.mxu0 0.0
    %840 = vmatprep.subr.mxu0 0.0
    %841 = vmatpush2.msra.mxu0 0.0
    %842 = vmatprep.subr.mxu0 0.0
    %843 = vmatpush2.msra.mxu0 0.0
    %844 = vmatprep.subr.mxu0 0.0
    %845 = vmatpush2.msra.mxu0 0.0
    %846 = vmatprep.subr.mxu0 0.0
    %847 = vmatpush2.msra.mxu0 0.0
    %848 = vmatprep.subr.mxu0 0.0
    %849 = vmatpush2.msra.mxu0 0.0
    %850 = vmatprep.mubr.f32.mxu0 0.0
    %851 = vmatmul.mubr.f32.gmra.mxu0 %v778
    %v852 = vpop.f32.mrf.mxu0
    %v853 = vadd.f32 0.0, %v852
    %v854 = vpop.f32.mrf.mxu0
    %v855 = vadd.f32 0.0, %v854
    %856 = vdwg.mxu0
    %857 = vmatprep.subr.mxu0 %v436
    %858 = vmatpush1.msra.mxu0 %v435
    %859 = vmatprep.subr.mxu0 %v432
    %860 = vmatpush1.msra.mxu0 %v431
    %861 = vmatprep.subr.mxu0 %v428
    %862 = vmatpush1.msra.mxu0 %v427
    %863 = vmatprep.subr.mxu0 %v424
    %864 = vmatpush1.msra.mxu0 %v423
    %865 = vmatprep.subr.mxu0 %v420
    %866 = vmatpush1.msra.mxu0 %v419
    %867 = vmatprep.subr.mxu0 %v416
    %868 = vmatpush1.msra.mxu0 %v415
    %869 = vmatprep.subr.mxu0 %v412
    %870 = vmatpush1.msra.mxu0 %v411
    %871 = vmatprep.subr.mxu0 %v408
    %872 = vmatpush1.msra.mxu0 %v407
    %873 = vmatprep.subr.mxu0 %v404
    %874 = vmatpush1.msra.mxu0 %v403
    %875 = vmatprep.subr.mxu0 %v400
    %876 = vmatpush1.msra.mxu0 %v399
    %877 = vmatprep.subr.mxu0 %v396
    %878 = vmatpush1.msra.mxu0 %v395
    %879 = vmatprep.subr.mxu0 %v392
    %880 = vmatpush1.msra.mxu0 %v391
    %881 = vmatprep.subr.mxu0 %v388
    %882 = vmatpush1.msra.mxu0 %v387
    %883 = vmatprep.subr.mxu0 %v384
    %884 = vmatpush1.msra.mxu0 %v383
    %885 = vmatprep.subr.mxu0 %v380
    %886 = vmatpush1.msra.mxu0 %v379
    %887 = vmatprep.subr.mxu0 %v376
    %888 = vmatpush1.msra.mxu0 %v375
    %889 = vmatprep.subr.mxu0 0.0
    %890 = vmatpush2.msra.mxu0 0.0
    %891 = vmatprep.subr.mxu0 0.0
    %892 = vmatpush2.msra.mxu0 0.0
    %893 = vmatprep.subr.mxu0 0.0
    %894 = vmatpush2.msra.mxu0 0.0
    %895 = vmatprep.subr.mxu0 0.0
    %896 = vmatpush2.msra.mxu0 0.0
    %897 = vmatprep.subr.mxu0 0.0
    %898 = vmatpush2.msra.mxu0 0.0
    %899 = vmatprep.subr.mxu0 0.0
    %900 = vmatpush2.msra.mxu0 0.0
    %901 = vmatprep.subr.mxu0 0.0
    %902 = vmatpush2.msra.mxu0 0.0
    %903 = vmatprep.subr.mxu0 0.0
    %904 = vmatpush2.msra.mxu0 0.0
    %905 = vmatprep.subr.mxu0 0.0
    %906 = vmatpush2.msra.mxu0 0.0
    %907 = vmatprep.subr.mxu0 0.0
    %908 = vmatpush2.msra.mxu0 0.0
    %909 = vmatprep.subr.mxu0 0.0
    %910 = vmatpush2.msra.mxu0 0.0
    %911 = vmatprep.subr.mxu0 0.0
    %912 = vmatpush2.msra.mxu0 0.0
    %913 = vmatprep.subr.mxu0 0.0
    %914 = vmatpush2.msra.mxu0 0.0
    %915 = vmatprep.subr.mxu0 0.0
    %916 = vmatpush2.msra.mxu0 0.0
    %917 = vmatprep.subr.mxu0 0.0
    %918 = vmatpush2.msra.mxu0 0.0
    %919 = vmatprep.subr.mxu0 0.0
    %920 = vmatpush2.msra.mxu0 0.0
    %921 = vmatprep.mubr.f32.mxu0 0.0
    %922 = vmatmul.mubr.f32.gmra.mxu0 %v778
    %v923 = vpop.f32.mrf.mxu0
    %v924 = vadd.f32 0.0, %v923
    %v925 = vpop.f32.mrf.mxu0
    %v926 = vadd.f32 0.0, %v925
    %927 = vdwg.mxu0
    %v928 = vadd.f32 %v782, %v853
    %v929 = vadd.f32 %v783, %v855
    %v930 = vadd.f32 %v784, %v924
    %v931 = vadd.f32 %v785, %v926
    %v932 = vmul.f32 %v928, 0.5
    %v933 = vtanh.pop %v932
    %v934 = vmul.f32 %v933, 0.5
    %v935 = vadd.f32 %v934, 0.5
    %v936 = vmul.f32 %v929, 0.5
    %v937 = vtanh.pop %v936
    %v938 = vmul.f32 %v937, 0.5
    %v939 = vadd.f32 %v938, 0.5
    %v940 = vtanh.pop %v930
    %v941 = vmul.f32 %v931, 0.5
    %v942 = vtanh.pop %v941
    %v943 = vmul.f32 %v942, 0.5
    %v944 = vadd.f32 %v943, 0.5
    %v945 = vmul.f32 %v939, %v776
    %v946 = vmul.f32 %v935, %v940
    %v947 = vadd.f32 %v945, %v946
    %v948 = vtanh.pop %v947
    %v949 = vmul.f32 %v944, %v948
    %s950 = smul.u32 3, 4
    %s951 = smul.addr %s950, 8
    %s952 = scalar_lea.vmem [#allocation2], %s951
    %v953 = vld [vmem:[%s952] sm:$0xff]
    %v954 = vld [vmem:[%s952 + $0x8] sm:$0xff]
    %v955 = vld [vmem:[%s952 + $0x10] sm:$0xff]
    %v956 = vld [vmem:[%s952 + $0x18] sm:$0xff]
    %957 = vmatprep.subr.mxu0 %v434
    %958 = vmatpush1.msra.mxu0 %v433
    %959 = vmatprep.subr.mxu0 %v430
    %960 = vmatpush1.msra.mxu0 %v429
    %961 = vmatprep.subr.mxu0 %v426
    %962 = vmatpush1.msra.mxu0 %v425
    %963 = vmatprep.subr.mxu0 %v422
    %964 = vmatpush1.msra.mxu0 %v421
    %965 = vmatprep.subr.mxu0 %v418
    %966 = vmatpush1.msra.mxu0 %v417
    %967 = vmatprep.subr.mxu0 %v414
    %968 = vmatpush1.msra.mxu0 %v413
    %969 = vmatprep.subr.mxu0 %v410
    %970 = vmatpush1.msra.mxu0 %v409
    %971 = vmatprep.subr.mxu0 %v406
    %972 = vmatpush1.msra.mxu0 %v405
    %973 = vmatprep.subr.mxu0 %v402
    %974 = vmatpush1.msra.mxu0 %v401
    %975 = vmatprep.subr.mxu0 %v398
    %976 = vmatpush1.msra.mxu0 %v397
    %977 = vmatprep.subr.mxu0 %v394
    %978 = vmatpush1.msra.mxu0 %v393
    %979 = vmatprep.subr.mxu0 %v390
    %980 = vmatpush1.msra.mxu0 %v389
    %981 = vmatprep.subr.mxu0 %v386
    %982 = vmatpush1.msra.mxu0 %v385
    %983 = vmatprep.subr.mxu0 %v382
    %984 = vmatpush1.msra.mxu0 %v381
    %985 = vmatprep.subr.mxu0 %v378
    %986 = vmatpush1.msra.mxu0 %v377
    %987 = vmatprep.subr.mxu0 %v374
    %988 = vmatpush1.msra.mxu0 %v373
    %989 = vmatprep.subr.mxu0 0.0
    %990 = vmatpush2.msra.mxu0 0.0
    %991 = vmatprep.subr.mxu0 0.0
    %992 = vmatpush2.msra.mxu0 0.0
    %993 = vmatprep.subr.mxu0 0.0
    %994 = vmatpush2.msra.mxu0 0.0
    %995 = vmatprep.subr.mxu0 0.0
    %996 = vmatpush2.msra.mxu0 0.0
    %997 = vmatprep.subr.mxu0 0.0
    %998 = vmatpush2.msra.mxu0 0.0
    %999 = vmatprep.subr.mxu0 0.0
    %1000 = vmatpush2.msra.mxu0 0.0
    %1001 = vmatprep.subr.mxu0 0.0
    %1002 = vmatpush2.msra.mxu0 0.0
    %1003 = vmatprep.subr.mxu0 0.0
    %1004 = vmatpush2.msra.mxu0 0.0
    %1005 = vmatprep.subr.mxu0 0.0
    %1006 = vmatpush2.msra.mxu0 0.0
    %1007 = vmatprep.subr.mxu0 0.0
    %1008 = vmatpush2.msra.mxu0 0.0
    %1009 = vmatprep.subr.mxu0 0.0
    %1010 = vmatpush2.msra.mxu0 0.0
    %1011 = vmatprep.subr.mxu0 0.0
    %1012 = vmatpush2.msra.mxu0 0.0
    %1013 = vmatprep.subr.mxu0 0.0
    %1014 = vmatpush2.msra.mxu0 0.0
    %1015 = vmatprep.subr.mxu0 0.0
    %1016 = vmatpush2.msra.mxu0 0.0
    %1017 = vmatprep.subr.mxu0 0.0
    %1018 = vmatpush2.msra.mxu0 0.0
    %1019 = vmatprep.subr.mxu0 0.0
    %1020 = vmatpush2.msra.mxu0 0.0
    %1021 = vmatprep.mubr.f32.mxu0 0.0
    %1022 = vmatmul.mubr.f32.gmra.mxu0 %v949
    %v1023 = vpop.f32.mrf.mxu0
    %v1024 = vadd.f32 0.0, %v1023
    %v1025 = vpop.f32.mrf.mxu0
    %v1026 = vadd.f32 0.0, %v1025
    %1027 = vdwg.mxu0
    %1028 = vmatprep.subr.mxu0 %v436
    %1029 = vmatpush1.msra.mxu0 %v435
    %1030 = vmatprep.subr.mxu0 %v432
    %1031 = vmatpush1.msra.mxu0 %v431
    %1032 = vmatprep.subr.mxu0 %v428
    %1033 = vmatpush1.msra.mxu0 %v427
    %1034 = vmatprep.subr.mxu0 %v424
    %1035 = vmatpush1.msra.mxu0 %v423
    %1036 = vmatprep.subr.mxu0 %v420
    %1037 = vmatpush1.msra.mxu0 %v419
    %1038 = vmatprep.subr.mxu0 %v416
    %1039 = vmatpush1.msra.mxu0 %v415
    %1040 = vmatprep.subr.mxu0 %v412
    %1041 = vmatpush1.msra.mxu0 %v411
    %1042 = vmatprep.subr.mxu0 %v408
    %1043 = vmatpush1.msra.mxu0 %v407
    %1044 = vmatprep.subr.mxu0 %v404
    %1045 = vmatpush1.msra.mxu0 %v403
    %1046 = vmatprep.subr.mxu0 %v400
    %1047 = vmatpush1.msra.mxu0 %v399
    %1048 = vmatprep.subr.mxu0 %v396
    %1049 = vmatpush1.msra.mxu0 %v395
    %1050 = vmatprep.subr.mxu0 %v392
    %1051 = vmatpush1.msra.mxu0 %v391
    %1052 = vmatprep.subr.mxu0 %v388
    %1053 = vmatpush1.msra.mxu0 %v387
    %1054 = vmatprep.subr.mxu0 %v384
    %1055 = vmatpush1.msra.mxu0 %v383
    %1056 = vmatprep.subr.mxu0 %v380
    %1057 = vmatpush1.msra.mxu0 %v379
    %1058 = vmatprep.subr.mxu0 %v376
    %1059 = vmatpush1.msra.mxu0 %v375
    %1060 = vmatprep.subr.mxu0 0.0
    %1061 = vmatpush2.msra.mxu0 0.0
    %1062 = vmatprep.subr.mxu0 0.0
    %1063 = vmatpush2.msra.mxu0 0.0
    %1064 = vmatprep.subr.mxu0 0.0
    %1065 = vmatpush2.msra.mxu0 0.0
    %1066 = vmatprep.subr.mxu0 0.0
    %1067 = vmatpush2.msra.mxu0 0.0
    %1068 = vmatprep.subr.mxu0 0.0
    %1069 = vmatpush2.msra.mxu0 0.0
    %1070 = vmatprep.subr.mxu0 0.0
    %1071 = vmatpush2.msra.mxu0 0.0
    %1072 = vmatprep.subr.mxu0 0.0
    %1073 = vmatpush2.msra.mxu0 0.0
    %1074 = vmatprep.subr.mxu0 0.0
    %1075 = vmatpush2.msra.mxu0 0.0
    %1076 = vmatprep.subr.mxu0 0.0
    %1077 = vmatpush2.msra.mxu0 0.0
    %1078 = vmatprep.subr.mxu0 0.0
    %1079 = vmatpush2.msra.mxu0 0.0
    %1080 = vmatprep.subr.mxu0 0.0
    %1081 = vmatpush2.msra.mxu0 0.0
    %1082 = vmatprep.subr.mxu0 0.0
    %1083 = vmatpush2.msra.mxu0 0.0
    %1084 = vmatprep.subr.mxu0 0.0
    %1085 = vmatpush2.msra.mxu0 0.0
    %1086 = vmatprep.subr.mxu0 0.0
    %1087 = vmatpush2.msra.mxu0 0.0
    %1088 = vmatprep.subr.mxu0 0.0
    %1089 = vmatpush2.msra.mxu0 0.0
    %1090 = vmatprep.subr.mxu0 0.0
    %1091 = vmatpush2.msra.mxu0 0.0
    %1092 = vmatprep.mubr.f32.mxu0 0.0
    %1093 = vmatmul.mubr.f32.gmra.mxu0 %v949
    %v1094 = vpop.f32.mrf.mxu0
    %v1095 = vadd.f32 0.0, %v1094
    %v1096 = vpop.f32.mrf.mxu0
    %v1097 = vadd.f32 0.0, %v1096
    %1098 = vdwg.mxu0
    %v1099 = vadd.f32 %v953, %v1024
    %v1100 = vadd.f32 %v954, %v1026
    %v1101 = vadd.f32 %v955, %v1095
    %v1102 = vadd.f32 %v956, %v1097
    %v1103 = vmul.f32 %v1099, 0.5
    %v1104 = vtanh.pop %v1103
    %v1105 = vmul.f32 %v1104, 0.5
    %v1106 = vadd.f32 %v1105, 0.5
    %v1107 = vmul.f32 %v1100, 0.5
    %v1108 = vtanh.pop %v1107
    %v1109 = vmul.f32 %v1108, 0.5
    %v1110 = vadd.f32 %v1109, 0.5
    %v1111 = vtanh.pop %v1101
    %v1112 = vmul.f32 %v1102, 0.5
    %v1113 = vtanh.pop %v1112
    %v1114 = vmul.f32 %v1113, 0.5
    %v1115 = vadd.f32 %v1114, 0.5
    %v1116 = vmul.f32 %v1110, %v947
    %v1117 = vmul.f32 %v1106, %v1111
    %v1118 = vadd.f32 %v1116, %v1117
    %v1119 = vtanh.pop %v1118
    %v1120 = vmul.f32 %v1115, %v1119
    %s1121 = smul.u32 4, 4
    %s1122 = smul.addr %s1121, 8
    %s1123 = scalar_lea.vmem [#allocation2], %s1122
    %v1124 = vld [vmem:[%s1123] sm:$0xff]
    %v1125 = vld [vmem:[%s1123 + $0x8] sm:$0xff]
    %v1126 = vld [vmem:[%s1123 + $0x10] sm:$0xff]
    %v1127 = vld [vmem:[%s1123 + $0x18] sm:$0xff]
    %1128 = vmatprep.subr.mxu0 %v434
    %1129 = vmatpush1.msra.mxu0 %v433
    %1130 = vmatprep.subr.mxu0 %v430
    %1131 = vmatpush1.msra.mxu0 %v429
    %1132 = vmatprep.subr.mxu0 %v426
    %1133 = vmatpush1.msra.mxu0 %v425
    %1134 = vmatprep.subr.mxu0 %v422
    %1135 = vmatpush1.msra.mxu0 %v421
    %1136 = vmatprep.subr.mxu0 %v418
    %1137 = vmatpush1.msra.mxu0 %v417
    %1138 = vmatprep.subr.mxu0 %v414
    %1139 = vmatpush1.msra.mxu0 %v413
    %1140 = vmatprep.subr.mxu0 %v410
    %1141 = vmatpush1.msra.mxu0 %v409
    %1142 = vmatprep.subr.mxu0 %v406
    %1143 = vmatpush1.msra.mxu0 %v405
    %1144 = vmatprep.subr.mxu0 %v402
    %1145 = vmatpush1.msra.mxu0 %v401
    %1146 = vmatprep.subr.mxu0 %v398
    %1147 = vmatpush1.msra.mxu0 %v397
    %1148 = vmatprep.subr.mxu0 %v394
    %1149 = vmatpush1.msra.mxu0 %v393
    %1150 = vmatprep.subr.mxu0 %v390
    %1151 = vmatpush1.msra.mxu0 %v389
    %1152 = vmatprep.subr.mxu0 %v386
    %1153 = vmatpush1.msra.mxu0 %v385
    %1154 = vmatprep.subr.mxu0 %v382
    %1155 = vmatpush1.msra.mxu0 %v381
    %1156 = vmatprep.subr.mxu0 %v378
    %1157 = vmatpush1.msra.mxu0 %v377
    %1158 = vmatprep.subr.mxu0 %v374
    %1159 = vmatpush1.msra.mxu0 %v373
    %1160 = vmatprep.subr.mxu0 0.0
    %1161 = vmatpush2.msra.mxu0 0.0
    %1162 = vmatprep.subr.mxu0 0.0
    %1163 = vmatpush2.msra.mxu0 0.0
    %1164 = vmatprep.subr.mxu0 0.0
    %1165 = vmatpush2.msra.mxu0 0.0
    %1166 = vmatprep.subr.mxu0 0.0
    %1167 = vmatpush2.msra.mxu0 0.0
    %1168 = vmatprep.subr.mxu0 0.0
    %1169 = vmatpush2.msra.mxu0 0.0
    %1170 = vmatprep.subr.mxu0 0.0
    %1171 = vmatpush2.msra.mxu0 0.0
    %1172 = vmatprep.subr.mxu0 0.0
    %1173 = vmatpush2.msra.mxu0 0.0
    %1174 = vmatprep.subr.mxu0 0.0
    %1175 = vmatpush2.msra.mxu0 0.0
    %1176 = vmatprep.subr.mxu0 0.0
    %1177 = vmatpush2.msra.mxu0 0.0
    %1178 = vmatprep.subr.mxu0 0.0
    %1179 = vmatpush2.msra.mxu0 0.0
    %1180 = vmatprep.subr.mxu0 0.0
    %1181 = vmatpush2.msra.mxu0 0.0
    %1182 = vmatprep.subr.mxu0 0.0
    %1183 = vmatpush2.msra.mxu0 0.0
    %1184 = vmatprep.subr.mxu0 0.0
    %1185 = vmatpush2.msra.mxu0 0.0
    %1186 = vmatprep.subr.mxu0 0.0
    %1187 = vmatpush2.msra.mxu0 0.0
    %1188 = vmatprep.subr.mxu0 0.0
    %1189 = vmatpush2.msra.mxu0 0.0
    %1190 = vmatprep.subr.mxu0 0.0
    %1191 = vmatpush2.msra.mxu0 0.0
    %1192 = vmatprep.mubr.f32.mxu0 0.0
    %1193 = vmatmul.mubr.f32.gmra.mxu0 %v1120
    %v1194 = vpop.f32.mrf.mxu0
    %v1195 = vadd.f32 0.0, %v1194
    %v1196 = vpop.f32.mrf.mxu0
    %v1197 = vadd.f32 0.0, %v1196
    %1198 = vdwg.mxu0
    %1199 = vmatprep.subr.mxu0 %v436
    %1200 = vmatpush1.msra.mxu0 %v435
    %1201 = vmatprep.subr.mxu0 %v432
    %1202 = vmatpush1.msra.mxu0 %v431
    %1203 = vmatprep.subr.mxu0 %v428
    %1204 = vmatpush1.msra.mxu0 %v427
    %1205 = vmatprep.subr.mxu0 %v424
    %1206 = vmatpush1.msra.mxu0 %v423
    %1207 = vmatprep.subr.mxu0 %v420
    %1208 = vmatpush1.msra.mxu0 %v419
    %1209 = vmatprep.subr.mxu0 %v416
    %1210 = vmatpush1.msra.mxu0 %v415
    %1211 = vmatprep.subr.mxu0 %v412
    %1212 = vmatpush1.msra.mxu0 %v411
    %1213 = vmatprep.subr.mxu0 %v408
    %1214 = vmatpush1.msra.mxu0 %v407
    %1215 = vmatprep.subr.mxu0 %v404
    %1216 = vmatpush1.msra.mxu0 %v403
    %1217 = vmatprep.subr.mxu0 %v400
    %1218 = vmatpush1.msra.mxu0 %v399
    %1219 = vmatprep.subr.mxu0 %v396
    %1220 = vmatpush1.msra.mxu0 %v395
    %1221 = vmatprep.subr.mxu0 %v392
    %1222 = vmatpush1.msra.mxu0 %v391
    %1223 = vmatprep.subr.mxu0 %v388
    %1224 = vmatpush1.msra.mxu0 %v387
    %1225 = vmatprep.subr.mxu0 %v384
    %1226 = vmatpush1.msra.mxu0 %v383
    %1227 = vmatprep.subr.mxu0 %v380
    %1228 = vmatpush1.msra.mxu0 %v379
    %1229 = vmatprep.subr.mxu0 %v376
    %1230 = vmatpush1.msra.mxu0 %v375
    %1231 = vmatprep.subr.mxu0 0.0
    %1232 = vmatpush2.msra.mxu0 0.0
    %1233 = vmatprep.subr.mxu0 0.0
    %1234 = vmatpush2.msra.mxu0 0.0
    %1235 = vmatprep.subr.mxu0 0.0
    %1236 = vmatpush2.msra.mxu0 0.0
    %1237 = vmatprep.subr.mxu0 0.0
    %1238 = vmatpush2.msra.mxu0 0.0
    %1239 = vmatprep.subr.mxu0 0.0
    %1240 = vmatpush2.msra.mxu0 0.0
    %1241 = vmatprep.subr.mxu0 0.0
    %1242 = vmatpush2.msra.mxu0 0.0
    %1243 = vmatprep.subr.mxu0 0.0
    %1244 = vmatpush2.msra.mxu0 0.0
    %1245 = vmatprep.subr.mxu0 0.0
    %1246 = vmatpush2.msra.mxu0 0.0
    %1247 = vmatprep.subr.mxu0 0.0
    %1248 = vmatpush2.msra.mxu0 0.0
    %1249 = vmatprep.subr.mxu0 0.0
    %1250 = vmatpush2.msra.mxu0 0.0
    %1251 = vmatprep.subr.mxu0 0.0
    %1252 = vmatpush2.msra.mxu0 0.0
    %1253 = vmatprep.subr.mxu0 0.0
    %1254 = vmatpush2.msra.mxu0 0.0
    %1255 = vmatprep.subr.mxu0 0.0
    %1256 = vmatpush2.msra.mxu0 0.0
    %1257 = vmatprep.subr.mxu0 0.0
    %1258 = vmatpush2.msra.mxu0 0.0
    %1259 = vmatprep.subr.mxu0 0.0
    %1260 = vmatpush2.msra.mxu0 0.0
    %1261 = vmatprep.subr.mxu0 0.0
    %1262 = vmatpush2.msra.mxu0 0.0
    %1263 = vmatprep.mubr.f32.mxu0 0.0
    %1264 = vmatmul.mubr.f32.gmra.mxu0 %v1120
    %v1265 = vpop.f32.mrf.mxu0
    %v1266 = vadd.f32 0.0, %v1265
    %v1267 = vpop.f32.mrf.mxu0
    %v1268 = vadd.f32 0.0, %v1267
    %1269 = vdwg.mxu0
    %v1270 = vadd.f32 %v1124, %v1195
    %v1271 = vadd.f32 %v1125, %v1197
    %v1272 = vadd.f32 %v1126, %v1266
    %v1273 = vadd.f32 %v1127, %v1268
    %v1274 = vmul.f32 %v1270, 0.5
    %v1275 = vtanh.pop %v1274
    %v1276 = vmul.f32 %v1275, 0.5
    %v1277 = vadd.f32 %v1276, 0.5
    %v1278 = vmul.f32 %v1271, 0.5
    %v1279 = vtanh.pop %v1278
    %v1280 = vmul.f32 %v1279, 0.5
    %v1281 = vadd.f32 %v1280, 0.5
    %v1282 = vtanh.pop %v1272
    %v1283 = vmul.f32 %v1273, 0.5
    %v1284 = vtanh.pop %v1283
    %v1285 = vmul.f32 %v1284, 0.5
    %v1286 = vadd.f32 %v1285, 0.5
    %v1287 = vmul.f32 %v1281, %v1118
    %v1288 = vmul.f32 %v1277, %v1282
    %v1289 = vadd.f32 %v1287, %v1288
    %v1290 = vtanh.pop %v1289
    %v1291 = vmul.f32 %v1286, %v1290
    %s1292 = smul.u32 5, 4
    %s1293 = smul.addr %s1292, 8
    %s1294 = scalar_lea.vmem [#allocation2], %s1293
    %v1295 = vld [vmem:[%s1294] sm:$0xff]
    %v1296 = vld [vmem:[%s1294 + $0x8] sm:$0xff]
    %v1297 = vld [vmem:[%s1294 + $0x10] sm:$0xff]
    %v1298 = vld [vmem:[%s1294 + $0x18] sm:$0xff]
    %1299 = vmatprep.subr.mxu0 %v434
    %1300 = vmatpush1.msra.mxu0 %v433
    %1301 = vmatprep.subr.mxu0 %v430
    %1302 = vmatpush1.msra.mxu0 %v429
    %1303 = vmatprep.subr.mxu0 %v426
    %1304 = vmatpush1.msra.mxu0 %v425
    %1305 = vmatprep.subr.mxu0 %v422
    %1306 = vmatpush1.msra.mxu0 %v421
    %1307 = vmatprep.subr.mxu0 %v418
    %1308 = vmatpush1.msra.mxu0 %v417
    %1309 = vmatprep.subr.mxu0 %v414
    %1310 = vmatpush1.msra.mxu0 %v413
    %1311 = vmatprep.subr.mxu0 %v410
    %1312 = vmatpush1.msra.mxu0 %v409
    %1313 = vmatprep.subr.mxu0 %v406
    %1314 = vmatpush1.msra.mxu0 %v405
    %1315 = vmatprep.subr.mxu0 %v402
    %1316 = vmatpush1.msra.mxu0 %v401
    %1317 = vmatprep.subr.mxu0 %v398
    %1318 = vmatpush1.msra.mxu0 %v397
    %1319 = vmatprep.subr.mxu0 %v394
    %1320 = vmatpush1.msra.mxu0 %v393
    %1321 = vmatprep.subr.mxu0 %v390
    %1322 = vmatpush1.msra.mxu0 %v389
    %1323 = vmatprep.subr.mxu0 %v386
    %1324 = vmatpush1.msra.mxu0 %v385
    %1325 = vmatprep.subr.mxu0 %v382
    %1326 = vmatpush1.msra.mxu0 %v381
    %1327 = vmatprep.subr.mxu0 %v378
    %1328 = vmatpush1.msra.mxu0 %v377
    %1329 = vmatprep.subr.mxu0 %v374
    %1330 = vmatpush1.msra.mxu0 %v373
    %1331 = vmatprep.subr.mxu0 0.0
    %1332 = vmatpush2.msra.mxu0 0.0
    %1333 = vmatprep.subr.mxu0 0.0
    %1334 = vmatpush2.msra.mxu0 0.0
    %1335 = vmatprep.subr.mxu0 0.0
    %1336 = vmatpush2.msra.mxu0 0.0
    %1337 = vmatprep.subr.mxu0 0.0
    %1338 = vmatpush2.msra.mxu0 0.0
    %1339 = vmatprep.subr.mxu0 0.0
    %1340 = vmatpush2.msra.mxu0 0.0
    %1341 = vmatprep.subr.mxu0 0.0
    %1342 = vmatpush2.msra.mxu0 0.0
    %1343 = vmatprep.subr.mxu0 0.0
    %1344 = vmatpush2.msra.mxu0 0.0
    %1345 = vmatprep.subr.mxu0 0.0
    %1346 = vmatpush2.msra.mxu0 0.0
    %1347 = vmatprep.subr.mxu0 0.0
    %1348 = vmatpush2.msra.mxu0 0.0
    %1349 = vmatprep.subr.mxu0 0.0
    %1350 = vmatpush2.msra.mxu0 0.0
    %1351 = vmatprep.subr.mxu0 0.0
    %1352 = vmatpush2.msra.mxu0 0.0
    %1353 = vmatprep.subr.mxu0 0.0
    %1354 = vmatpush2.msra.mxu0 0.0
    %1355 = vmatprep.subr.mxu0 0.0
    %1356 = vmatpush2.msra.mxu0 0.0
    %1357 = vmatprep.subr.mxu0 0.0
    %1358 = vmatpush2.msra.mxu0 0.0
    %1359 = vmatprep.subr.mxu0 0.0
    %1360 = vmatpush2.msra.mxu0 0.0
    %1361 = vmatprep.subr.mxu0 0.0
    %1362 = vmatpush2.msra.mxu0 0.0
    %1363 = vmatprep.mubr.f32.mxu0 0.0
    %1364 = vmatmul.mubr.f32.gmra.mxu0 %v1291
    %v1365 = vpop.f32.mrf.mxu0
    %v1366 = vadd.f32 0.0, %v1365
    %v1367 = vpop.f32.mrf.mxu0
    %v1368 = vadd.f32 0.0, %v1367
    %1369 = vdwg.mxu0
    %1370 = vmatprep.subr.mxu0 %v436
    %1371 = vmatpush1.msra.mxu0 %v435
    %1372 = vmatprep.subr.mxu0 %v432
    %1373 = vmatpush1.msra.mxu0 %v431
    %1374 = vmatprep.subr.mxu0 %v428
    %1375 = vmatpush1.msra.mxu0 %v427
    %1376 = vmatprep.subr.mxu0 %v424
    %1377 = vmatpush1.msra.mxu0 %v423
    %1378 = vmatprep.subr.mxu0 %v420
    %1379 = vmatpush1.msra.mxu0 %v419
    %1380 = vmatprep.subr.mxu0 %v416
    %1381 = vmatpush1.msra.mxu0 %v415
    %1382 = vmatprep.subr.mxu0 %v412
    %1383 = vmatpush1.msra.mxu0 %v411
    %1384 = vmatprep.subr.mxu0 %v408
    %1385 = vmatpush1.msra.mxu0 %v407
    %1386 = vmatprep.subr.mxu0 %v404
    %1387 = vmatpush1.msra.mxu0 %v403
    %1388 = vmatprep.subr.mxu0 %v400
    %1389 = vmatpush1.msra.mxu0 %v399
    %1390 = vmatprep.subr.mxu0 %v396
    %1391 = vmatpush1.msra.mxu0 %v395
    %1392 = vmatprep.subr.mxu0 %v392
    %1393 = vmatpush1.msra.mxu0 %v391
    %1394 = vmatprep.subr.mxu0 %v388
    %1395 = vmatpush1.msra.mxu0 %v387
    %1396 = vmatprep.subr.mxu0 %v384
    %1397 = vmatpush1.msra.mxu0 %v383
    %1398 = vmatprep.subr.mxu0 %v380
    %1399 = vmatpush1.msra.mxu0 %v379
    %1400 = vmatprep.subr.mxu0 %v376
    %1401 = vmatpush1.msra.mxu0 %v375
    %1402 = vmatprep.subr.mxu0 0.0
    %1403 = vmatpush2.msra.mxu0 0.0
    %1404 = vmatprep.subr.mxu0 0.0
    %1405 = vmatpush2.msra.mxu0 0.0
    %1406 = vmatprep.subr.mxu0 0.0
    %1407 = vmatpush2.msra.mxu0 0.0
    %1408 = vmatprep.subr.mxu0 0.0
    %1409 = vmatpush2.msra.mxu0 0.0
    %1410 = vmatprep.subr.mxu0 0.0
    %1411 = vmatpush2.msra.mxu0 0.0
    %1412 = vmatprep.subr.mxu0 0.0
    %1413 = vmatpush2.msra.mxu0 0.0
    %1414 = vmatprep.subr.mxu0 0.0
    %1415 = vmatpush2.msra.mxu0 0.0
    %1416 = vmatprep.subr.mxu0 0.0
    %1417 = vmatpush2.msra.mxu0 0.0
    %1418 = vmatprep.subr.mxu0 0.0
    %1419 = vmatpush2.msra.mxu0 0.0
    %1420 = vmatprep.subr.mxu0 0.0
    %1421 = vmatpush2.msra.mxu0 0.0
    %1422 = vmatprep.subr.mxu0 0.0
    %1423 = vmatpush2.msra.mxu0 0.0
    %1424 = vmatprep.subr.mxu0 0.0
    %1425 = vmatpush2.msra.mxu0 0.0
    %1426 = vmatprep.subr.mxu0 0.0
    %1427 = vmatpush2.msra.mxu0 0.0
    %1428 = vmatprep.subr.mxu0 0.0
    %1429 = vmatpush2.msra.mxu0 0.0
    %1430 = vmatprep.subr.mxu0 0.0
    %1431 = vmatpush2.msra.mxu0 0.0
    %1432 = vmatprep.subr.mxu0 0.0
    %1433 = vmatpush2.msra.mxu0 0.0
    %1434 = vmatprep.mubr.f32.mxu0 0.0
    %1435 = vmatmul.mubr.f32.gmra.mxu0 %v1291
    %v1436 = vpop.f32.mrf.mxu0
    %v1437 = vadd.f32 0.0, %v1436
    %v1438 = vpop.f32.mrf.mxu0
    %v1439 = vadd.f32 0.0, %v1438
    %1440 = vdwg.mxu0
    %v1441 = vadd.f32 %v1295, %v1366
    %v1442 = vadd.f32 %v1296, %v1368
    %v1443 = vadd.f32 %v1297, %v1437
    %v1444 = vadd.f32 %v1298, %v1439
    %v1445 = vmul.f32 %v1441, 0.5
    %v1446 = vtanh.pop %v1445
    %v1447 = vmul.f32 %v1446, 0.5
    %v1448 = vadd.f32 %v1447, 0.5
    %v1449 = vmul.f32 %v1442, 0.5
    %v1450 = vtanh.pop %v1449
    %v1451 = vmul.f32 %v1450, 0.5
    %v1452 = vadd.f32 %v1451, 0.5
    %v1453 = vtanh.pop %v1443
    %v1454 = vmul.f32 %v1444, 0.5
    %v1455 = vtanh.pop %v1454
    %v1456 = vmul.f32 %v1455, 0.5
    %v1457 = vadd.f32 %v1456, 0.5
    %v1458 = vmul.f32 %v1452, %v1289
    %v1459 = vmul.f32 %v1448, %v1453
    %v1460 = vadd.f32 %v1458, %v1459
    %v1461 = vtanh.pop %v1460
    %v1462 = vmul.f32 %v1457, %v1461
    %s1463 = smul.u32 6, 4
    %s1464 = smul.addr %s1463, 8
    %s1465 = scalar_lea.vmem [#allocation2], %s1464
    %v1466 = vld [vmem:[%s1465] sm:$0xff]
    %v1467 = vld [vmem:[%s1465 + $0x8] sm:$0xff]
    %v1468 = vld [vmem:[%s1465 + $0x10] sm:$0xff]
    %v1469 = vld [vmem:[%s1465 + $0x18] sm:$0xff]
    %1470 = vmatprep.subr.mxu0 %v434
    %1471 = vmatpush1.msra.mxu0 %v433
    %1472 = vmatprep.subr.mxu0 %v430
    %1473 = vmatpush1.msra.mxu0 %v429
    %1474 = vmatprep.subr.mxu0 %v426
    %1475 = vmatpush1.msra.mxu0 %v425
    %1476 = vmatprep.subr.mxu0 %v422
    %1477 = vmatpush1.msra.mxu0 %v421
    %1478 = vmatprep.subr.mxu0 %v418
    %1479 = vmatpush1.msra.mxu0 %v417
    %1480 = vmatprep.subr.mxu0 %v414
    %1481 = vmatpush1.msra.mxu0 %v413
    %1482 = vmatprep.subr.mxu0 %v410
    %1483 = vmatpush1.msra.mxu0 %v409
    %1484 = vmatprep.subr.mxu0 %v406
    %1485 = vmatpush1.msra.mxu0 %v405
    %1486 = vmatprep.subr.mxu0 %v402
    %1487 = vmatpush1.msra.mxu0 %v401
    %1488 = vmatprep.subr.mxu0 %v398
    %1489 = vmatpush1.msra.mxu0 %v397
    %1490 = vmatprep.subr.mxu0 %v394
    %1491 = vmatpush1.msra.mxu0 %v393
    %1492 = vmatprep.subr.mxu0 %v390
    %1493 = vmatpush1.msra.mxu0 %v389
    %1494 = vmatprep.subr.mxu0 %v386
    %1495 = vmatpush1.msra.mxu0 %v385
    %1496 = vmatprep.subr.mxu0 %v382
    %1497 = vmatpush1.msra.mxu0 %v381
    %1498 = vmatprep.subr.mxu0 %v378
    %1499 = vmatpush1.msra.mxu0 %v377
    %1500 = vmatprep.subr.mxu0 %v374
    %1501 = vmatpush1.msra.mxu0 %v373
    %1502 = vmatprep.subr.mxu0 0.0
    %1503 = vmatpush2.msra.mxu0 0.0
    %1504 = vmatprep.subr.mxu0 0.0
    %1505 = vmatpush2.msra.mxu0 0.0
    %1506 = vmatprep.subr.mxu0 0.0
    %1507 = vmatpush2.msra.mxu0 0.0
    %1508 = vmatprep.subr.mxu0 0.0
    %1509 = vmatpush2.msra.mxu0 0.0
    %1510 = vmatprep.subr.mxu0 0.0
    %1511 = vmatpush2.msra.mxu0 0.0
    %1512 = vmatprep.subr.mxu0 0.0
    %1513 = vmatpush2.msra.mxu0 0.0
    %1514 = vmatprep.subr.mxu0 0.0
    %1515 = vmatpush2.msra.mxu0 0.0
    %1516 = vmatprep.subr.mxu0 0.0
    %1517 = vmatpush2.msra.mxu0 0.0
    %1518 = vmatprep.subr.mxu0 0.0
    %1519 = vmatpush2.msra.mxu0 0.0
    %1520 = vmatprep.subr.mxu0 0.0
    %1521 = vmatpush2.msra.mxu0 0.0
    %1522 = vmatprep.subr.mxu0 0.0
    %1523 = vmatpush2.msra.mxu0 0.0
    %1524 = vmatprep.subr.mxu0 0.0
    %1525 = vmatpush2.msra.mxu0 0.0
    %1526 = vmatprep.subr.mxu0 0.0
    %1527 = vmatpush2.msra.mxu0 0.0
    %1528 = vmatprep.subr.mxu0 0.0
    %1529 = vmatpush2.msra.mxu0 0.0
    %1530 = vmatprep.subr.mxu0 0.0
    %1531 = vmatpush2.msra.mxu0 0.0
    %1532 = vmatprep.subr.mxu0 0.0
    %1533 = vmatpush2.msra.mxu0 0.0
    %1534 = vmatprep.mubr.f32.mxu0 0.0
    %1535 = vmatmul.mubr.f32.gmra.mxu0 %v1462
    %v1536 = vpop.f32.mrf.mxu0
    %v1537 = vadd.f32 0.0, %v1536
    %v1538 = vpop.f32.mrf.mxu0
    %v1539 = vadd.f32 0.0, %v1538
    %1540 = vdwg.mxu0
    %1541 = vmatprep.subr.mxu0 %v436
    %1542 = vmatpush1.msra.mxu0 %v435
    %1543 = vmatprep.subr.mxu0 %v432
    %1544 = vmatpush1.msra.mxu0 %v431
    %1545 = vmatprep.subr.mxu0 %v428
    %1546 = vmatpush1.msra.mxu0 %v427
    %1547 = vmatprep.subr.mxu0 %v424
    %1548 = vmatpush1.msra.mxu0 %v423
    %1549 = vmatprep.subr.mxu0 %v420
    %1550 = vmatpush1.msra.mxu0 %v419
    %1551 = vmatprep.subr.mxu0 %v416
    %1552 = vmatpush1.msra.mxu0 %v415
    %1553 = vmatprep.subr.mxu0 %v412
    %1554 = vmatpush1.msra.mxu0 %v411
    %1555 = vmatprep.subr.mxu0 %v408
    %1556 = vmatpush1.msra.mxu0 %v407
    %1557 = vmatprep.subr.mxu0 %v404
    %1558 = vmatpush1.msra.mxu0 %v403
    %1559 = vmatprep.subr.mxu0 %v400
    %1560 = vmatpush1.msra.mxu0 %v399
    %1561 = vmatprep.subr.mxu0 %v396
    %1562 = vmatpush1.msra.mxu0 %v395
    %1563 = vmatprep.subr.mxu0 %v392
    %1564 = vmatpush1.msra.mxu0 %v391
    %1565 = vmatprep.subr.mxu0 %v388
    %1566 = vmatpush1.msra.mxu0 %v387
    %1567 = vmatprep.subr.mxu0 %v384
    %1568 = vmatpush1.msra.mxu0 %v383
    %1569 = vmatprep.subr.mxu0 %v380
    %1570 = vmatpush1.msra.mxu0 %v379
    %1571 = vmatprep.subr.mxu0 %v376
    %1572 = vmatpush1.msra.mxu0 %v375
    %1573 = vmatprep.subr.mxu0 0.0
    %1574 = vmatpush2.msra.mxu0 0.0
    %1575 = vmatprep.subr.mxu0 0.0
    %1576 = vmatpush2.msra.mxu0 0.0
    %1577 = vmatprep.subr.mxu0 0.0
    %1578 = vmatpush2.msra.mxu0 0.0
    %1579 = vmatprep.subr.mxu0 0.0
    %1580 = vmatpush2.msra.mxu0 0.0
    %1581 = vmatprep.subr.mxu0 0.0
    %1582 = vmatpush2.msra.mxu0 0.0
    %1583 = vmatprep.subr.mxu0 0.0
    %1584 = vmatpush2.msra.mxu0 0.0
    %1585 = vmatprep.subr.mxu0 0.0
    %1586 = vmatpush2.msra.mxu0 0.0
    %1587 = vmatprep.subr.mxu0 0.0
    %1588 = vmatpush2.msra.mxu0 0.0
    %1589 = vmatprep.subr.mxu0 0.0
    %1590 = vmatpush2.msra.mxu0 0.0
    %1591 = vmatprep.subr.mxu0 0.0
    %1592 = vmatpush2.msra.mxu0 0.0
    %1593 = vmatprep.subr.mxu0 0.0
    %1594 = vmatpush2.msra.mxu0 0.0
    %1595 = vmatprep.subr.mxu0 0.0
    %1596 = vmatpush2.msra.mxu0 0.0
    %1597 = vmatprep.subr.mxu0 0.0
    %1598 = vmatpush2.msra.mxu0 0.0
    %1599 = vmatprep.subr.mxu0 0.0
    %1600 = vmatpush2.msra.mxu0 0.0
    %1601 = vmatprep.subr.mxu0 0.0
    %1602 = vmatpush2.msra.mxu0 0.0
    %1603 = vmatprep.subr.mxu0 0.0
    %1604 = vmatpush2.msra.mxu0 0.0
    %1605 = vmatprep.mubr.f32.mxu0 0.0
    %1606 = vmatmul.mubr.f32.gmra.mxu0 %v1462
    %v1607 = vpop.f32.mrf.mxu0
    %v1608 = vadd.f32 0.0, %v1607
    %v1609 = vpop.f32.mrf.mxu0
    %v1610 = vadd.f32 0.0, %v1609
    %1611 = vdwg.mxu0
    %v1612 = vadd.f32 %v1466, %v1537
    %v1613 = vadd.f32 %v1467, %v1539
    %v1614 = vadd.f32 %v1468, %v1608
    %v1615 = vadd.f32 %v1469, %v1610
    %v1616 = vmul.f32 %v1612, 0.5
    %v1617 = vtanh.pop %v1616
    %v1618 = vmul.f32 %v1617, 0.5
    %v1619 = vadd.f32 %v1618, 0.5
    %v1620 = vmul.f32 %v1613, 0.5
    %v1621 = vtanh.pop %v1620
    %v1622 = vmul.f32 %v1621, 0.5
    %v1623 = vadd.f32 %v1622, 0.5
    %v1624 = vtanh.pop %v1614
    %v1625 = vmul.f32 %v1615, 0.5
    %v1626 = vtanh.pop %v1625
    %v1627 = vmul.f32 %v1626, 0.5
    %v1628 = vadd.f32 %v1627, 0.5
    %v1629 = vmul.f32 %v1623, %v1460
    %v1630 = vmul.f32 %v1619, %v1624
    %v1631 = vadd.f32 %v1629, %v1630
    %v1632 = vtanh.pop %v1631
    %v1633 = vmul.f32 %v1628, %v1632
    %s1634 = smul.u32 7, 4
    %s1635 = smul.addr %s1634, 8
    %s1636 = scalar_lea.vmem [#allocation2], %s1635
    %v1637 = vld [vmem:[%s1636] sm:$0xff]
    %v1638 = vld [vmem:[%s1636 + $0x8] sm:$0xff]
    %v1639 = vld [vmem:[%s1636 + $0x10] sm:$0xff]
    %v1640 = vld [vmem:[%s1636 + $0x18] sm:$0xff]
    %1641 = vmatprep.subr.mxu0 %v434
    %1642 = vmatpush1.msra.mxu0 %v433
    %1643 = vmatprep.subr.mxu0 %v430
    %1644 = vmatpush1.msra.mxu0 %v429
    %1645 = vmatprep.subr.mxu0 %v426
    %1646 = vmatpush1.msra.mxu0 %v425
    %1647 = vmatprep.subr.mxu0 %v422
    %1648 = vmatpush1.msra.mxu0 %v421
    %1649 = vmatprep.subr.mxu0 %v418
    %1650 = vmatpush1.msra.mxu0 %v417
    %1651 = vmatprep.subr.mxu0 %v414
    %1652 = vmatpush1.msra.mxu0 %v413
    %1653 = vmatprep.subr.mxu0 %v410
    %1654 = vmatpush1.msra.mxu0 %v409
    %1655 = vmatprep.subr.mxu0 %v406
    %1656 = vmatpush1.msra.mxu0 %v405
    %1657 = vmatprep.subr.mxu0 %v402
    %1658 = vmatpush1.msra.mxu0 %v401
    %1659 = vmatprep.subr.mxu0 %v398
    %1660 = vmatpush1.msra.mxu0 %v397
    %1661 = vmatprep.subr.mxu0 %v394
    %1662 = vmatpush1.msra.mxu0 %v393
    %1663 = vmatprep.subr.mxu0 %v390
    %1664 = vmatpush1.msra.mxu0 %v389
    %1665 = vmatprep.subr.mxu0 %v386
    %1666 = vmatpush1.msra.mxu0 %v385
    %1667 = vmatprep.subr.mxu0 %v382
    %1668 = vmatpush1.msra.mxu0 %v381
    %1669 = vmatprep.subr.mxu0 %v378
    %1670 = vmatpush1.msra.mxu0 %v377
    %1671 = vmatprep.subr.mxu0 %v374
    %1672 = vmatpush1.msra.mxu0 %v373
    %1673 = vmatprep.subr.mxu0 0.0
    %1674 = vmatpush2.msra.mxu0 0.0
    %1675 = vmatprep.subr.mxu0 0.0
    %1676 = vmatpush2.msra.mxu0 0.0
    %1677 = vmatprep.subr.mxu0 0.0
    %1678 = vmatpush2.msra.mxu0 0.0
    %1679 = vmatprep.subr.mxu0 0.0
    %1680 = vmatpush2.msra.mxu0 0.0
    %1681 = vmatprep.subr.mxu0 0.0
    %1682 = vmatpush2.msra.mxu0 0.0
    %1683 = vmatprep.subr.mxu0 0.0
    %1684 = vmatpush2.msra.mxu0 0.0
    %1685 = vmatprep.subr.mxu0 0.0
    %1686 = vmatpush2.msra.mxu0 0.0
    %1687 = vmatprep.subr.mxu0 0.0
    %1688 = vmatpush2.msra.mxu0 0.0
    %1689 = vmatprep.subr.mxu0 0.0
    %1690 = vmatpush2.msra.mxu0 0.0
    %1691 = vmatprep.subr.mxu0 0.0
    %1692 = vmatpush2.msra.mxu0 0.0
    %1693 = vmatprep.subr.mxu0 0.0
    %1694 = vmatpush2.msra.mxu0 0.0
    %1695 = vmatprep.subr.mxu0 0.0
    %1696 = vmatpush2.msra.mxu0 0.0
    %1697 = vmatprep.subr.mxu0 0.0
    %1698 = vmatpush2.msra.mxu0 0.0
    %1699 = vmatprep.subr.mxu0 0.0
    %1700 = vmatpush2.msra.mxu0 0.0
    %1701 = vmatprep.subr.mxu0 0.0
    %1702 = vmatpush2.msra.mxu0 0.0
    %1703 = vmatprep.subr.mxu0 0.0
    %1704 = vmatpush2.msra.mxu0 0.0
    %1705 = vmatprep.mubr.f32.mxu0 0.0
    %1706 = vmatmul.mubr.f32.gmra.mxu0 %v1633
    %v1707 = vpop.f32.mrf.mxu0
    %v1708 = vadd.f32 0.0, %v1707
    %v1709 = vpop.f32.mrf.mxu0
    %v1710 = vadd.f32 0.0, %v1709
    %1711 = vdwg.mxu0
    %1712 = vmatprep.subr.mxu0 %v436
    %1713 = vmatpush1.msra.mxu0 %v435
    %1714 = vmatprep.subr.mxu0 %v432
    %1715 = vmatpush1.msra.mxu0 %v431
    %1716 = vmatprep.subr.mxu0 %v428
    %1717 = vmatpush1.msra.mxu0 %v427
    %1718 = vmatprep.subr.mxu0 %v424
    %1719 = vmatpush1.msra.mxu0 %v423
    %1720 = vmatprep.subr.mxu0 %v420
    %1721 = vmatpush1.msra.mxu0 %v419
    %1722 = vmatprep.subr.mxu0 %v416
    %1723 = vmatpush1.msra.mxu0 %v415
    %1724 = vmatprep.subr.mxu0 %v412
    %1725 = vmatpush1.msra.mxu0 %v411
    %1726 = vmatprep.subr.mxu0 %v408
    %1727 = vmatpush1.msra.mxu0 %v407
    %1728 = vmatprep.subr.mxu0 %v404
    %1729 = vmatpush1.msra.mxu0 %v403
    %1730 = vmatprep.subr.mxu0 %v400
    %1731 = vmatpush1.msra.mxu0 %v399
    %1732 = vmatprep.subr.mxu0 %v396
    %1733 = vmatpush1.msra.mxu0 %v395
    %1734 = vmatprep.subr.mxu0 %v392
    %1735 = vmatpush1.msra.mxu0 %v391
    %1736 = vmatprep.subr.mxu0 %v388
    %1737 = vmatpush1.msra.mxu0 %v387
    %1738 = vmatprep.subr.mxu0 %v384
    %1739 = vmatpush1.msra.mxu0 %v383
    %1740 = vmatprep.subr.mxu0 %v380
    %1741 = vmatpush1.msra.mxu0 %v379
    %1742 = vmatprep.subr.mxu0 %v376
    %1743 = vmatpush1.msra.mxu0 %v375
    %1744 = vmatprep.subr.mxu0 0.0
    %1745 = vmatpush2.msra.mxu0 0.0
    %1746 = vmatprep.subr.mxu0 0.0
    %1747 = vmatpush2.msra.mxu0 0.0
    %1748 = vmatprep.subr.mxu0 0.0
    %1749 = vmatpush2.msra.mxu0 0.0
    %1750 = vmatprep.subr.mxu0 0.0
    %1751 = vmatpush2.msra.mxu0 0.0
    %1752 = vmatprep.subr.mxu0 0.0
    %1753 = vmatpush2.msra.mxu0 0.0
    %1754 = vmatprep.subr.mxu0 0.0
    %1755 = vmatpush2.msra.mxu0 0.0
    %1756 = vmatprep.subr.mxu0 0.0
    %1757 = vmatpush2.msra.mxu0 0.0
    %1758 = vmatprep.subr.mxu0 0.0
    %1759 = vmatpush2.msra.mxu0 0.0
    %1760 = vmatprep.subr.mxu0 0.0
    %1761 = vmatpush2.msra.mxu0 0.0
    %1762 = vmatprep.subr.mxu0 0.0
    %1763 = vmatpush2.msra.mxu0 0.0
    %1764 = vmatprep.subr.mxu0 0.0
    %1765 = vmatpush2.msra.mxu0 0.0
    %1766 = vmatprep.subr.mxu0 0.0
    %1767 = vmatpush2.msra.mxu0 0.0
    %1768 = vmatprep.subr.mxu0 0.0
    %1769 = vmatpush2.msra.mxu0 0.0
    %1770 = vmatprep.subr.mxu0 0.0
    %1771 = vmatpush2.msra.mxu0 0.0
    %1772 = vmatprep.subr.mxu0 0.0
    %1773 = vmatpush2.msra.mxu0 0.0
    %1774 = vmatprep.subr.mxu0 0.0
    %1775 = vmatpush2.msra.mxu0 0.0
    %1776 = vmatprep.mubr.f32.mxu0 0.0
    %1777 = vmatmul.mubr.f32.gmra.mxu0 %v1633
    %v1778 = vpop.f32.mrf.mxu0
    %v1779 = vadd.f32 0.0, %v1778
    %v1780 = vpop.f32.mrf.mxu0
    %v1781 = vadd.f32 0.0, %v1780
    %1782 = vdwg.mxu0
    %v1783 = vadd.f32 %v1637, %v1708
    %v1784 = vadd.f32 %v1638, %v1710
    %v1785 = vadd.f32 %v1639, %v1779
    %v1786 = vadd.f32 %v1640, %v1781
    %v1787 = vmul.f32 %v1783, 0.5
    %v1788 = vtanh.pop %v1787
    %v1789 = vmul.f32 %v1788, 0.5
    %v1790 = vadd.f32 %v1789, 0.5
    %v1791 = vmul.f32 %v1784, 0.5
    %v1792 = vtanh.pop %v1791
    %v1793 = vmul.f32 %v1792, 0.5
    %v1794 = vadd.f32 %v1793, 0.5
    %v1795 = vtanh.pop %v1785
    %v1796 = vmul.f32 %v1786, 0.5
    %v1797 = vtanh.pop %v1796
    %v1798 = vmul.f32 %v1797, 0.5
    %v1799 = vadd.f32 %v1798, 0.5
    %v1800 = vmul.f32 %v1794, %v1631
    %v1801 = vmul.f32 %v1790, %v1795
    %v1802 = vadd.f32 %v1800, %v1801
    %v1803 = vtanh.pop %v1802
    %v1804 = vmul.f32 %v1799, %v1803
    %v1805 = vld [vmem:[#allocation6] sm:$0xff]
    %v1806 = vld [vmem:[#allocation6 + $0x8] sm:$0xff]
    %v1807 = vld [vmem:[#allocation6 + $0x10] sm:$0xff]
    %v1808 = vld [vmem:[#allocation6 + $0x18] sm:$0xff]
    %v1809 = vld [vmem:[#allocation6 + $0x20] sm:$0xff]
    %v1810 = vld [vmem:[#allocation6 + $0x28] sm:$0xff]
    %v1811 = vld [vmem:[#allocation6 + $0x30] sm:$0xff]
    %v1812 = vld [vmem:[#allocation6 + $0x38] sm:$0xff]
    %v1813 = vld [vmem:[#allocation6 + $0x40] sm:$0xff]
    %v1814 = vld [vmem:[#allocation6 + $0x48] sm:$0xff]
    %v1815 = vld [vmem:[#allocation6 + $0x50] sm:$0xff]
    %v1816 = vld [vmem:[#allocation6 + $0x58] sm:$0xff]
    %v1817 = vld [vmem:[#allocation6 + $0x60] sm:$0xff]
    %v1818 = vld [vmem:[#allocation6 + $0x68] sm:$0xff]
    %v1819 = vld [vmem:[#allocation6 + $0x70] sm:$0xff]
    %v1820 = vld [vmem:[#allocation6 + $0x78] sm:$0xff]
    %v1821 = vld [vmem:[%s5] sm:$0x1]
    %v1823 = vlaneseq
    %v1824 = vshrl.u32 %v1823, 7
    %v1825 = vsub.s32 0, %v1824
    %v1826 = vrot.slane %v1821, %v1825
    %1828 = vmatprep.subr.mxu0 0.0
    %1829 = vmatpush1.msra.mxu0 %v1820
    %1830 = vmatprep.subr.mxu0 0.0
    %1831 = vmatpush1.msra.mxu0 %v1819
    %1832 = vmatprep.subr.mxu0 0.0
    %1833 = vmatpush1.msra.mxu0 %v1818
    %1834 = vmatprep.subr.mxu0 0.0
    %1835 = vmatpush1.msra.mxu0 %v1817
    %1836 = vmatprep.subr.mxu0 0.0
    %1837 = vmatpush1.msra.mxu0 %v1816
    %1838 = vmatprep.subr.mxu0 0.0
    %1839 = vmatpush1.msra.mxu0 %v1815
    %1840 = vmatprep.subr.mxu0 0.0
    %1841 = vmatpush1.msra.mxu0 %v1814
    %1842 = vmatprep.subr.mxu0 0.0
    %1843 = vmatpush1.msra.mxu0 %v1813
    %1844 = vmatprep.subr.mxu0 0.0
    %1845 = vmatpush1.msra.mxu0 %v1812
    %1846 = vmatprep.subr.mxu0 0.0
    %1847 = vmatpush1.msra.mxu0 %v1811
    %1848 = vmatprep.subr.mxu0 0.0
    %1849 = vmatpush1.msra.mxu0 %v1810
    %1850 = vmatprep.subr.mxu0 0.0
    %1851 = vmatpush1.msra.mxu0 %v1809
    %1852 = vmatprep.subr.mxu0 0.0
    %1853 = vmatpush1.msra.mxu0 %v1808
    %1854 = vmatprep.subr.mxu0 0.0
    %1855 = vmatpush1.msra.mxu0 %v1807
    %1856 = vmatprep.subr.mxu0 0.0
    %1857 = vmatpush1.msra.mxu0 %v1806
    %1858 = vmatprep.subr.mxu0 0.0
    %1859 = vmatpush1.msra.mxu0 %v1805
    %1860 = vmatprep.subr.mxu0 0.0
    %1861 = vmatpush2.msra.mxu0 0.0
    %1862 = vmatprep.subr.mxu0 0.0
    %1863 = vmatpush2.msra.mxu0 0.0
    %1864 = vmatprep.subr.mxu0 0.0
    %1865 = vmatpush2.msra.mxu0 0.0
    %1866 = vmatprep.subr.mxu0 0.0
    %1867 = vmatpush2.msra.mxu0 0.0
    %1868 = vmatprep.subr.mxu0 0.0
    %1869 = vmatpush2.msra.mxu0 0.0
    %1870 = vmatprep.subr.mxu0 0.0
    %1871 = vmatpush2.msra.mxu0 0.0
    %1872 = vmatprep.subr.mxu0 0.0
    %1873 = vmatpush2.msra.mxu0 0.0
    %1874 = vmatprep.subr.mxu0 0.0
    %1875 = vmatpush2.msra.mxu0 0.0
    %1876 = vmatprep.subr.mxu0 0.0
    %1877 = vmatpush2.msra.mxu0 0.0
    %1878 = vmatprep.subr.mxu0 0.0
    %1879 = vmatpush2.msra.mxu0 0.0
    %1880 = vmatprep.subr.mxu0 0.0
    %1881 = vmatpush2.msra.mxu0 0.0
    %1882 = vmatprep.subr.mxu0 0.0
    %1883 = vmatpush2.msra.mxu0 0.0
    %1884 = vmatprep.subr.mxu0 0.0
    %1885 = vmatpush2.msra.mxu0 0.0
    %1886 = vmatprep.subr.mxu0 0.0
    %1887 = vmatpush2.msra.mxu0 0.0
    %1888 = vmatprep.subr.mxu0 0.0
    %1889 = vmatpush2.msra.mxu0 0.0
    %1890 = vmatprep.subr.mxu0 0.0
    %1891 = vmatpush2.msra.mxu0 0.0
    %1892 = vmatprep.mubr.f32.mxu0 0.0
    %1893 = vmatmul.mubr.f32.gmra.mxu0 %v1804
    %v1894 = vpop.f32.mrf.mxu0
    %v1895 = vadd.f32 %v1826, %v1894
    %v1896 = vpop.f32.mrf.mxu0
    %1897 = vdwg.mxu0
    %1898 = vst [vmem:[#allocation8] sm:$0xff] %v1895
    // Predicated region
    $region34: #{tpu_custom_call.1} parent=1 // pred_check
      _
    $region35: #{tpu_custom_call.1} parent=1 // pred_check_branch
      %1900 = sbr.rel (0) target = $region37
    $region36: #{tpu_custom_call.1} parent=1 // pred_region
      %s1902 = ssub.s32 128, 128
      %1903 = vsyncadd [#allocation5], %s1902
      %s1905 = sshll.u32 [#allocation8], 4
      %s1906 = int_to_ptr.vmem [resolvable:$true] %s1905
      %1908 = dma.vmem_to_hbm [thread:$0]  %s1906, 128, %s6, [#allocation5]
    $region37: #{tpu_custom_call.1} parent=1 // pred_fallthru
      _
    // Predicated region
    $region38: #{tpu_custom_call.1} parent=1 // pred_check
      _
    $region39: #{tpu_custom_call.1} parent=1 // pred_check_branch
      %1910 = sbr.rel (0) target = $region41
    $region40: #{tpu_custom_call.1} parent=1 // pred_region
      %1911 = dma.done [#allocation5], 128
    $region41: #{tpu_custom_call.1} parent=1 // pred_fallthru
      _
    %1912 = vsyncpa [#allocation4], 1
    %1913 = vsyncpa [#allocation7], 1
    %1914 = vsyncpa [#allocation5], 1

</llo_original>
